<compile_context>
chip_gen: v5e
topology: v5e:2x2
jax: 0.10.0
libtpu: 0.0.40
codegen_flags: <defaults>
</compile_context>

<pallas_src>
import math

import jax
import jax.numpy as jnp
from jax import lax
from jax.experimental import pallas as pl
from jax.experimental.pallas import tpu as pltpu

# ---------------- model hyper-parameters (small, consistent w/ module) ------
EMBED_DIM = 96          # embedding_dim in the reference code
NUM_HEADS = 8
HEAD_DIM = EMBED_DIM // NUM_HEADS   # 12
FF_DIM = 512
# TODO(synk): the reference Tokenizer is empty (vocab_size would be 1); a
# synthetic vocab of 32 is used so the embedding / classifier are non-trivial.
VOCAB = 32
BATCH = 2
SEQ = 8
BS = BATCH * SEQ        # 16  flattened (batch, seq) rows
HBS = NUM_HEADS * BS    # 128 head-stacked rows: ordered (head, batch, seq)
LN_EPS = 1e-5
NEG_INF = -1e30

# slab96 row offsets (last dim = 96, lane-dense)
R_EMB = 0                          # rows   0 ..  31 : embedding table
R_WO = R_EMB + VOCAB               # rows  32 .. 127 : out_proj_w.T  (96, 96)
R_W2 = R_WO + EMBED_DIM            # rows 128 .. 639 : w2.T          (512, 96)
R_VEC = R_W2 + FF_DIM              # rows 640 .. 645 : bo, ln1_g, ln1_b, ln2_g, ln2_b, b2
S96_ROWS = R_VEC + 6               # 646

# slab_wide column offsets (rows 0..95 = weights, row 96 = bias row)
C_W1 = 0                           # cols   0 .. 511 : w1.T (96, 512), b1 in row 96
C_QKV = C_W1 + FF_DIM              # cols 512 .. 799 : Wqkv (96, 288), bqkv in row 96
WIDE_COLS = C_QKV + 3 * EMBED_DIM  # 800


def _layernorm(z, gamma, beta):
    mu = jnp.mean(z, axis=-1, keepdims=True)
    var = jnp.mean((z - mu) ** 2, axis=-1, keepdims=True)
    return (z - mu) * lax.rsqrt(var + LN_EPS) * gamma + beta


def transformer_kernel(tok_ref,    # (BS, 1)  int32 token ids
                       mask_ref,   # (HBS, HBS) additive block-diagonal mask
                       s96_ref,    # (S96_ROWS, E) row-stacked 96-wide slab
                       wide_ref,   # (E+1, WIDE_COLS) [w1.T | Wqkv] + bias row
                       fc_ref,     # (E+1, VOCAB) [wfc.T ; bfc]
                       out_ref):   # (BATCH, VOCAB)
    # --- embedding lookup fused as a one-hot matmul (no XLA gather) ---------
    onehot = (tok_ref[...] ==
              lax.broadcasted_iota(jnp.int32, (BS, VOCAB), 1)).astype(jnp.float32)
    x = jnp.dot(onehot, s96_ref[R_EMB:R_EMB + VOCAB, :],
                preferred_element_type=jnp.float32)                        # (BS, E)

    # --- fused QKV projection: ONE (16,96)x(96,288) matmul ------------------
    qkv = jnp.dot(x, wide_ref[0:EMBED_DIM, C_QKV:C_QKV + 3 * EMBED_DIM],
                  preferred_element_type=jnp.float32)
    qkv = qkv + wide_ref[EMBED_DIM:EMBED_DIM + 1, C_QKV:C_QKV + 3 * EMBED_DIM]

    # Head-stacked relayout (lane slices -> sublane stack): (HBS, Dh).
    q_all = jnp.concatenate(
        [qkv[:, h * HEAD_DIM:(h + 1) * HEAD_DIM] for h in range(NUM_HEADS)], axis=0)
    k_all = jnp.concatenate(
        [qkv[:, EMBED_DIM + h * HEAD_DIM:EMBED_DIM + (h + 1) * HEAD_DIM]
         for h in range(NUM_HEADS)], axis=0)
    v_all = jnp.concatenate(
        [qkv[:, 2 * EMBED_DIM + h * HEAD_DIM:2 * EMBED_DIM + (h + 1) * HEAD_DIM]
         for h in range(NUM_HEADS)], axis=0)

    # --- single block-diagonal score / softmax / PV path --------------------
    s = lax.dot_general(q_all, k_all, (((1,), (1,)), ((), ())),
                        preferred_element_type=jnp.float32) + mask_ref[...]   # (128,128)
    s = s - jnp.max(s, axis=-1, keepdims=True)
    p = jnp.exp(s)
    p = p / jnp.sum(p, axis=-1, keepdims=True)          # exact division (review)
    pv = jnp.dot(p, v_all, preferred_element_type=jnp.float32)            # (HBS, Dh)

    # Relayout back (sublane blocks -> lane concat) + ONE dense out-projection.
    attn_cat = jnp.concatenate(
        [pv[h * BS:(h + 1) * BS, :] for h in range(NUM_HEADS)], axis=1)   # (BS, E)
    attn = jnp.dot(attn_cat, s96_ref[R_WO:R_WO + EMBED_DIM, :],
                   preferred_element_type=jnp.float32)
    attn = attn + s96_ref[R_VEC + 0:R_VEC + 1, :]                         # out_proj bias

    # dropout1 / dropout2 are identity in eval mode.
    out1 = _layernorm(x + attn, s96_ref[R_VEC + 1:R_VEC + 2, :],
                      s96_ref[R_VEC + 2:R_VEC + 3, :])

    # --- feed-forward --------------------------------------------------------
    h1 = jnp.dot(out1, wide_ref[0:EMBED_DIM, C_W1:C_W1 + FF_DIM],
                 preferred_element_type=jnp.float32)
    h1 = jnp.maximum(h1 + wide_ref[EMBED_DIM:EMBED_DIM + 1, C_W1:C_W1 + FF_DIM], 0.0)
    ffn = jnp.dot(h1, s96_ref[R_W2:R_W2 + FF_DIM, :],
                  preferred_element_type=jnp.float32)
    ffn = ffn + s96_ref[R_VEC + 5:R_VEC + 6, :]
    out2 = _layernorm(out1 + ffn, s96_ref[R_VEC + 3:R_VEC + 4, :],
                      s96_ref[R_VEC + 4:R_VEC + 5, :])

    # --- mean-pool over sequence (per batch) + classifier + softmax ----------
    pooled = jnp.concatenate(
        [jnp.mean(out2[b * SEQ:(b + 1) * SEQ, :], axis=0, keepdims=True)
         for b in range(BATCH)], axis=0)                                  # (B, E)
    logits = jnp.dot(pooled, fc_ref[0:EMBED_DIM, :],
                     preferred_element_type=jnp.float32)
    logits = logits + fc_ref[EMBED_DIM:EMBED_DIM + 1, :]
    logits = logits - jnp.max(logits, axis=-1, keepdims=True)
    pexp = jnp.exp(logits)
    out_ref[...] = pexp / jnp.sum(pexp, axis=-1, keepdims=True)


# ------------------- one-time weight re-layout for the kernel ----------------
def prepare_kernel_inputs(p):
    scale = 1.0 / math.sqrt(HEAD_DIM)
    wq, wk, wv = jnp.split(p["in_proj_w"], 3, axis=0)          # each (E_out, E_in)
    bq, bk, bv = jnp.split(p["in_proj_b"], 3, axis=0)          # each (E,)

    # Kernel computes x @ Wqkv; fold the 1/sqrt(Dh) scale into the Q columns.
    wqkv = jnp.concatenate([wq.T * scale, wk.T, wv.T], axis=1)            # (E, 3E)
    bqkv = jnp.concatenate([bq * scale, bk, bv], axis=0).reshape(1, 3 * EMBED_DIM)

    # slab96: everything whose last dim is E, row-stacked (lane-dense).
    slab96 = jnp.concatenate([
        p["emb"],                                                          # (V, E)
        p["out_proj_w"].T,                                                 # (E, E)
        p["w2"].T,                                                         # (FF, E)
        p["out_proj_b"].reshape(1, EMBED_DIM),
        p["ln1_g"].reshape(1, EMBED_DIM), p["ln1_b"].reshape(1, EMBED_DIM),
        p["ln2_g"].reshape(1, EMBED_DIM), p["ln2_b"].reshape(1, EMBED_DIM),
        p["b2"].reshape(1, EMBED_DIM),
    ], axis=0).astype(jnp.float32)                                         # (646, E)
    assert slab96.shape == (S96_ROWS, EMBED_DIM)

    # slab_wide: [w1.T | Wqkv] with the two bias rows appended as row E.
    w_top = jnp.concatenate([p["w1"].T, wqkv], axis=1)                     # (E, 800)
    b_row = jnp.concatenate([p["b1"].reshape(1, FF_DIM), bqkv], axis=1)    # (1, 800)
    slab_wide = jnp.concatenate([w_top, b_row], axis=0).astype(jnp.float32)
    assert slab_wide.shape == (EMBED_DIM + 1, WIDE_COLS)

    # fc slab: [wfc.T ; bfc]
    fc_slab = jnp.concatenate(
        [p["wfc"].T, p["bfc"].reshape(1, VOCAB)], axis=0).astype(jnp.float32)

    # Additive block-diagonal attention mask over head-stacked rows
    # (rows ordered (head, batch, seq); each (head, batch) group is SEQ rows).
    g = jnp.arange(HBS) // SEQ
    mask = jnp.where(g[:, None] == g[None, :], 0.0, NEG_INF).astype(jnp.float32)

    return dict(slab96=slab96, slab_wide=slab_wide, fc_slab=fc_slab, mask=mask)


def transformer_model(tokens, kin):
    """tokens: (B, S) int32 ids. Returns (B, VOCAB) softmax probabilities."""
    tok2d = tokens.reshape(BS, 1).astype(jnp.int32)
    vmem = lambda: pl.BlockSpec(memory_space=pltpu.MemorySpace.VMEM)
    # Single grid-less invocation: ~0.65 MiB of inputs, ~5 MFLOP; everything
    # lives in VMEM at once, 5 DMAs total.
    return pl.pallas_call(
        transformer_kernel,
        out_shape=jax.ShapeDtypeStruct((BATCH, VOCAB), jnp.float32),
        in_specs=[vmem() for _ in range(5)],
        out_specs=vmem(),
        cost_estimate=pl.CostEstimate(flops=5_300_000,
                                      transcendentals=16_600,
                                      bytes_accessed=650_000),
    )(tok2d, kin["mask"], kin["slab96"], kin["slab_wide"], kin["fc_slab"])


# -------------------- deterministic parameter construction ------------------
def make_params(key):
    ks = jax.random.split(key, 11)
    init = lambda k, shape, s=0.05: (s * jax.random.normal(k, shape)).astype(jnp.float32)
    return {
        # nn.Embedding(vocab, E). (Third positional arg of nn.Embedding in the
        # spec is padding_idx=max_length=100, out of range for the synthetic
        # vocab and therefore a no-op for the forward pass.)
        "emb": init(ks[0], (VOCAB, EMBED_DIM), 1.0),
        # nn.MultiheadAttention canonical params
        "in_proj_w": init(ks[1], (3 * EMBED_DIM, EMBED_DIM)),
        "in_proj_b": init(ks[2], (3 * EMBED_DIM,)),
        "out_proj_w": init(ks[3], (EMBED_DIM, EMBED_DIM)),
        "out_proj_b": init(ks[4], (EMBED_DIM,)),
        "ln1_g": jnp.ones((EMBED_DIM,), jnp.float32),
        "ln1_b": jnp.zeros((EMBED_DIM,), jnp.float32),
        "ln2_g": jnp.ones((EMBED_DIM,), jnp.float32),
        "ln2_b": jnp.zeros((EMBED_DIM,), jnp.float32),
        # ffn = Linear(E, FF) -> ReLU -> Linear(FF, E)
        "w1": init(ks[5], (FF_DIM, EMBED_DIM)),
        "b1": init(ks[6], (FF_DIM,)),
        "w2": init(ks[7], (EMBED_DIM, FF_DIM)),
        "b2": init(ks[8], (EMBED_DIM,)),
        # fc = Linear(E, vocab)
        "wfc": init(ks[9], (VOCAB, EMBED_DIM)),
        "bfc": init(ks[10], (VOCAB,)),
    }


# -------------------------- pure-JAX reference -------------------------------
def reference_forward(tokens, p):
    """Mirror of the PyTorch eval forward, using canonical param layout."""
    x = p["emb"][tokens]                                       # (B, S, E)

    def per_batch(xb):                                         # (S, E)
        qkv = xb @ p["in_proj_w"].T + p["in_proj_b"]
        q, k, v = jnp.split(qkv, 3, axis=-1)
        scale = 1.0 / math.sqrt(HEAD_DIM)
        outs = []
        for h in range(NUM_HEADS):
            sl = slice(h * HEAD_DIM, (h + 1) * HEAD_DIM)
            s = (q[:, sl] * scale) @ k[:, sl].T
            outs.append(jax.nn.softmax(s, axis=-1) @ v[:, sl])
        attn = jnp.concatenate(outs, axis=-1) @ p["out_proj_w"].T + p["out_proj_b"]
        out1 = _layernorm(xb + attn, p["ln1_g"], p["ln1_b"])
        ffn = jnp.maximum(out1 @ p["w1"].T + p["b1"], 0.0) @ p["w2"].T + p["b2"]
        out2 = _layernorm(out1 + ffn, p["ln2_g"], p["ln2_b"])
        pooled = jnp.mean(out2, axis=0)
        return jax.nn.softmax(pooled @ p["wfc"].T + p["bfc"], axis=-1)

    return jax.vmap(per_batch)(x)


if __name__ == "__main__":
    key = jax.random.PRNGKey(0)
    kp, kt = jax.random.split(key)
    params = make_params(kp)
    tokens = jax.random.randint(kt, (BATCH, SEQ), 0, VOCAB, dtype=jnp.int32)

    kin = prepare_kernel_inputs(params)          # one-time weight re-layout
    out = transformer_model(tokens, kin)
    out = jax.block_until_ready(out)

    ref = reference_forward(tokens, params)
    assert out.shape == (BATCH, VOCAB)
    assert bool(jnp.all(jnp.isfinite(out)))
    assert bool(jnp.allclose(jnp.sum(out, axis=-1), 1.0, atol=1e-4))
    assert bool(jnp.allclose(out, ref, rtol=2e-3, atol=2e-5))
    print("KERNEL_OK")
</pallas_src>

<mosaic_0001>
module attributes {stable_mosaic.version = 11 : i64} {
  func.func @transformer_kernel(%arg0: memref<16x1xi32, #tpu.memory_space<vmem>>, %arg1: memref<128x128xf32, #tpu.memory_space<vmem>>, %arg2: memref<646x96xf32, #tpu.memory_space<vmem>>, %arg3: memref<97x800xf32, #tpu.memory_space<vmem>>, %arg4: memref<97x32xf32, #tpu.memory_space<vmem>>, %arg5: memref<2x32xf32, #tpu.memory_space<vmem>>) attributes {dimension_semantics = [], scalar_prefetch = 0 : i64, scratch_operands = 0 : i64, tpu.core_type = #tpu.core_type<tc>} {
    %c0 = arith.constant 0 : index
    %c0_0 = arith.constant 0 : index
    %0 = vector.load %arg0[%c0, %c0_0] : memref<16x1xi32, #tpu.memory_space<vmem>>, vector<16x1xi32>
    %1 = tpu.iota {dimensions = array<i32: 1>} : vector<16x32xi32>
    %2 = vector.broadcast %0 : vector<16x1xi32> to vector<16x32xi32>
    %3 = arith.cmpi eq, %2, %1 : vector<16x32xi32>
    %4 = arith.extui %3 : vector<16x32xi1> to vector<16x32xi32>
    %5 = arith.sitofp %4 : vector<16x32xi32> to vector<16x32xf32>
    %c0_1 = arith.constant 0 : index
    %c0_2 = arith.constant 0 : index
    %6 = vector.load %arg2[%c0_1, %c0_2] : memref<646x96xf32, #tpu.memory_space<vmem>>, vector<32x96xf32>
    %cst = arith.constant dense<0.000000e+00> : vector<16x96xf32>
    %7 = tpu.matmul %5, %6, %cst {dimension_numbers = #tpu.dot_dimension_numbers<[1], [0], [0], [1], [0, 0, 1, 1], [], []>} : vector<16x32xf32>, vector<32x96xf32>, vector<16x96xf32> -> vector<16x96xf32>
    %c0_3 = arith.constant 0 : index
    %c512 = arith.constant 512 : index
    %8 = vector.load %arg3[%c0_3, %c512] : memref<97x800xf32, #tpu.memory_space<vmem>>, vector<96x288xf32>
    %cst_4 = arith.constant dense<0.000000e+00> : vector<16x288xf32>
    %9 = tpu.matmul %7, %8, %cst_4 {dimension_numbers = #tpu.dot_dimension_numbers<[1], [0], [0], [1], [0, 0, 1, 1], [], []>} : vector<16x96xf32>, vector<96x288xf32>, vector<16x288xf32> -> vector<16x288xf32>
    %c96 = arith.constant 96 : index
    %c512_5 = arith.constant 512 : index
    %10 = vector.load %arg3[%c96, %c512_5] : memref<97x800xf32, #tpu.memory_space<vmem>>, vector<1x288xf32>
    %11 = vector.broadcast %10 : vector<1x288xf32> to vector<16x288xf32>
    %12 = arith.addf %9, %11 : vector<16x288xf32>
    %13 = vector.extract_strided_slice %12 {offsets = [0, 0], sizes = [16, 12], strides = [1, 1]} : vector<16x288xf32> to vector<16x12xf32>
    %14 = vector.extract_strided_slice %12 {offsets = [0, 12], sizes = [16, 12], strides = [1, 1]} : vector<16x288xf32> to vector<16x12xf32>
    %15 = vector.extract_strided_slice %12 {offsets = [0, 24], sizes = [16, 12], strides = [1, 1]} : vector<16x288xf32> to vector<16x12xf32>
    %16 = vector.extract_strided_slice %12 {offsets = [0, 36], sizes = [16, 12], strides = [1, 1]} : vector<16x288xf32> to vector<16x12xf32>
    %17 = vector.extract_strided_slice %12 {offsets = [0, 48], sizes = [16, 12], strides = [1, 1]} : vector<16x288xf32> to vector<16x12xf32>
    %18 = vector.extract_strided_slice %12 {offsets = [0, 60], sizes = [16, 12], strides = [1, 1]} : vector<16x288xf32> to vector<16x12xf32>
    %19 = vector.extract_strided_slice %12 {offsets = [0, 72], sizes = [16, 12], strides = [1, 1]} : vector<16x288xf32> to vector<16x12xf32>
    %20 = vector.extract_strided_slice %12 {offsets = [0, 84], sizes = [16, 12], strides = [1, 1]} : vector<16x288xf32> to vector<16x12xf32>
    %21 = tpu.concatenate %13, %14, %15, %16, %17, %18, %19, %20 in 0 : vector<16x12xf32>, vector<16x12xf32>, vector<16x12xf32>, vector<16x12xf32>, vector<16x12xf32>, vector<16x12xf32>, vector<16x12xf32>, vector<16x12xf32> -> vector<128x12xf32>
    %22 = vector.extract_strided_slice %12 {offsets = [0, 96], sizes = [16, 12], strides = [1, 1]} : vector<16x288xf32> to vector<16x12xf32>
    %23 = vector.extract_strided_slice %12 {offsets = [0, 108], sizes = [16, 12], strides = [1, 1]} : vector<16x288xf32> to vector<16x12xf32>
    %24 = vector.extract_strided_slice %12 {offsets = [0, 120], sizes = [16, 12], strides = [1, 1]} : vector<16x288xf32> to vector<16x12xf32>
    %25 = vector.extract_strided_slice %12 {offsets = [0, 132], sizes = [16, 12], strides = [1, 1]} : vector<16x288xf32> to vector<16x12xf32>
    %26 = vector.extract_strided_slice %12 {offsets = [0, 144], sizes = [16, 12], strides = [1, 1]} : vector<16x288xf32> to vector<16x12xf32>
    %27 = vector.extract_strided_slice %12 {offsets = [0, 156], sizes = [16, 12], strides = [1, 1]} : vector<16x288xf32> to vector<16x12xf32>
    %28 = vector.extract_strided_slice %12 {offsets = [0, 168], sizes = [16, 12], strides = [1, 1]} : vector<16x288xf32> to vector<16x12xf32>
    %29 = vector.extract_strided_slice %12 {offsets = [0, 180], sizes = [16, 12], strides = [1, 1]} : vector<16x288xf32> to vector<16x12xf32>
    %30 = tpu.concatenate %22, %23, %24, %25, %26, %27, %28, %29 in 0 : vector<16x12xf32>, vector<16x12xf32>, vector<16x12xf32>, vector<16x12xf32>, vector<16x12xf32>, vector<16x12xf32>, vector<16x12xf32>, vector<16x12xf32> -> vector<128x12xf32>
    %31 = vector.extract_strided_slice %12 {offsets = [0, 192], sizes = [16, 12], strides = [1, 1]} : vector<16x288xf32> to vector<16x12xf32>
    %32 = vector.extract_strided_slice %12 {offsets = [0, 204], sizes = [16, 12], strides = [1, 1]} : vector<16x288xf32> to vector<16x12xf32>
    %33 = vector.extract_strided_slice %12 {offsets = [0, 216], sizes = [16, 12], strides = [1, 1]} : vector<16x288xf32> to vector<16x12xf32>
    %34 = vector.extract_strided_slice %12 {offsets = [0, 228], sizes = [16, 12], strides = [1, 1]} : vector<16x288xf32> to vector<16x12xf32>
    %35 = vector.extract_strided_slice %12 {offsets = [0, 240], sizes = [16, 12], strides = [1, 1]} : vector<16x288xf32> to vector<16x12xf32>
    %36 = vector.extract_strided_slice %12 {offsets = [0, 252], sizes = [16, 12], strides = [1, 1]} : vector<16x288xf32> to vector<16x12xf32>
    %37 = vector.extract_strided_slice %12 {offsets = [0, 264], sizes = [16, 12], strides = [1, 1]} : vector<16x288xf32> to vector<16x12xf32>
    %38 = vector.extract_strided_slice %12 {offsets = [0, 276], sizes = [16, 12], strides = [1, 1]} : vector<16x288xf32> to vector<16x12xf32>
    %39 = tpu.concatenate %31, %32, %33, %34, %35, %36, %37, %38 in 0 : vector<16x12xf32>, vector<16x12xf32>, vector<16x12xf32>, vector<16x12xf32>, vector<16x12xf32>, vector<16x12xf32>, vector<16x12xf32>, vector<16x12xf32> -> vector<128x12xf32>
    %cst_6 = arith.constant dense<0.000000e+00> : vector<128x128xf32>
    %40 = tpu.matmul %21, %30, %cst_6 {dimension_numbers = #tpu.dot_dimension_numbers<[1], [1], [0], [0], [0, 0, 1, 0], [], []>} : vector<128x12xf32>, vector<128x12xf32>, vector<128x128xf32> -> vector<128x128xf32>
    %c0_7 = arith.constant 0 : index
    %c0_8 = arith.constant 0 : index
    %41 = vector.load %arg1[%c0_7, %c0_8] : memref<128x128xf32, #tpu.memory_space<vmem>>, vector<128x128xf32>
    %42 = arith.addf %40, %41 : vector<128x128xf32>
    %cst_9 = arith.constant dense<0xFF800000> : vector<128xf32>
    %43 = vector.multi_reduction <maximumf>, %42, %cst_9 [1] : vector<128x128xf32> to vector<128xf32>
    %44 = vector.shape_cast %43 : vector<128xf32> to vector<128x1xf32>
    %45 = vector.broadcast %44 : vector<128x1xf32> to vector<128x128xf32>
    %46 = arith.subf %42, %45 : vector<128x128xf32>
    %47 = math.exp %46 : vector<128x128xf32>
    %cst_10 = arith.constant dense<0.000000e+00> : vector<128xf32>
    %48 = vector.multi_reduction <add>, %47, %cst_10 [1] : vector<128x128xf32> to vector<128xf32>
    %49 = vector.shape_cast %48 : vector<128xf32> to vector<128x1xf32>
    %50 = vector.broadcast %49 : vector<128x1xf32> to vector<128x128xf32>
    %51 = arith.divf %47, %50 : vector<128x128xf32>
    %cst_11 = arith.constant dense<0.000000e+00> : vector<128x12xf32>
    %52 = tpu.matmul %51, %39, %cst_11 {dimension_numbers = #tpu.dot_dimension_numbers<[1], [0], [0], [1], [0, 0, 1, 1], [], []>} : vector<128x128xf32>, vector<128x12xf32>, vector<128x12xf32> -> vector<128x12xf32>
    %53 = vector.extract_strided_slice %52 {offsets = [0, 0], sizes = [16, 12], strides = [1, 1]} : vector<128x12xf32> to vector<16x12xf32>
    %54 = vector.extract_strided_slice %52 {offsets = [16, 0], sizes = [16, 12], strides = [1, 1]} : vector<128x12xf32> to vector<16x12xf32>
    %55 = vector.extract_strided_slice %52 {offsets = [32, 0], sizes = [16, 12], strides = [1, 1]} : vector<128x12xf32> to vector<16x12xf32>
    %56 = vector.extract_strided_slice %52 {offsets = [48, 0], sizes = [16, 12], strides = [1, 1]} : vector<128x12xf32> to vector<16x12xf32>
    %57 = vector.extract_strided_slice %52 {offsets = [64, 0], sizes = [16, 12], strides = [1, 1]} : vector<128x12xf32> to vector<16x12xf32>
    %58 = vector.extract_strided_slice %52 {offsets = [80, 0], sizes = [16, 12], strides = [1, 1]} : vector<128x12xf32> to vector<16x12xf32>
    %59 = vector.extract_strided_slice %52 {offsets = [96, 0], sizes = [16, 12], strides = [1, 1]} : vector<128x12xf32> to vector<16x12xf32>
    %60 = vector.extract_strided_slice %52 {offsets = [112, 0], sizes = [16, 12], strides = [1, 1]} : vector<128x12xf32> to vector<16x12xf32>
    %61 = tpu.concatenate %53, %54, %55, %56, %57, %58, %59, %60 in 1 : vector<16x12xf32>, vector<16x12xf32>, vector<16x12xf32>, vector<16x12xf32>, vector<16x12xf32>, vector<16x12xf32>, vector<16x12xf32>, vector<16x12xf32> -> vector<16x96xf32>
    %c32 = arith.constant 32 : index
    %c0_12 = arith.constant 0 : index
    %62 = vector.load %arg2[%c32, %c0_12] : memref<646x96xf32, #tpu.memory_space<vmem>>, vector<96x96xf32>
    %cst_13 = arith.constant dense<0.000000e+00> : vector<16x96xf32>
    %63 = tpu.matmul %61, %62, %cst_13 {dimension_numbers = #tpu.dot_dimension_numbers<[1], [0], [0], [1], [0, 0, 1, 1], [], []>} : vector<16x96xf32>, vector<96x96xf32>, vector<16x96xf32> -> vector<16x96xf32>
    %c640 = arith.constant 640 : index
    %c0_14 = arith.constant 0 : index
    %64 = vector.load %arg2[%c640, %c0_14] : memref<646x96xf32, #tpu.memory_space<vmem>>, vector<1x96xf32>
    %65 = vector.broadcast %64 : vector<1x96xf32> to vector<16x96xf32>
    %66 = arith.addf %63, %65 : vector<16x96xf32>
    %67 = arith.addf %7, %66 : vector<16x96xf32>
    %c641 = arith.constant 641 : index
    %c0_15 = arith.constant 0 : index
    %68 = vector.load %arg2[%c641, %c0_15] : memref<646x96xf32, #tpu.memory_space<vmem>>, vector<1x96xf32>
    %c642 = arith.constant 642 : index
    %c0_16 = arith.constant 0 : index
    %69 = vector.load %arg2[%c642, %c0_16] : memref<646x96xf32, #tpu.memory_space<vmem>>, vector<1x96xf32>
    %cst_17 = arith.constant dense<0.000000e+00> : vector<16xf32>
    %70 = vector.multi_reduction <add>, %67, %cst_17 [1] : vector<16x96xf32> to vector<16xf32>
    %71 = vector.shape_cast %70 : vector<16xf32> to vector<16x1xf32>
    %cst_18 = arith.constant 9.600000e+01 : f32
    %72 = vector.broadcast %cst_18 : f32 to vector<16x1xf32>
    %73 = arith.divf %71, %72 : vector<16x1xf32>
    %74 = vector.broadcast %73 : vector<16x1xf32> to vector<16x96xf32>
    %75 = arith.subf %67, %74 : vector<16x96xf32>
    %76 = arith.mulf %75, %75 : vector<16x96xf32>
    %cst_19 = arith.constant dense<0.000000e+00> : vector<16xf32>
    %77 = vector.multi_reduction <add>, %76, %cst_19 [1] : vector<16x96xf32> to vector<16xf32>
    %78 = vector.shape_cast %77 : vector<16xf32> to vector<16x1xf32>
    %cst_20 = arith.constant 9.600000e+01 : f32
    %79 = vector.broadcast %cst_20 : f32 to vector<16x1xf32>
    %80 = arith.divf %78, %79 : vector<16x1xf32>
    %81 = vector.broadcast %73 : vector<16x1xf32> to vector<16x96xf32>
    %82 = arith.subf %67, %81 : vector<16x96xf32>
    %cst_21 = arith.constant 9.99999974E-6 : f32
    %83 = vector.broadcast %cst_21 : f32 to vector<16x1xf32>
    %84 = arith.addf %80, %83 : vector<16x1xf32>
    %85 = math.rsqrt %84 : vector<16x1xf32>
    %86 = vector.broadcast %85 : vector<16x1xf32> to vector<16x96xf32>
    %87 = arith.mulf %82, %86 : vector<16x96xf32>
    %88 = vector.broadcast %68 : vector<1x96xf32> to vector<16x96xf32>
    %89 = arith.mulf %87, %88 : vector<16x96xf32>
    %90 = vector.broadcast %69 : vector<1x96xf32> to vector<16x96xf32>
    %91 = arith.addf %89, %90 : vector<16x96xf32>
    %c0_22 = arith.constant 0 : index
    %c0_23 = arith.constant 0 : index
    %92 = vector.load %arg3[%c0_22, %c0_23] : memref<97x800xf32, #tpu.memory_space<vmem>>, vector<96x512xf32>
    %cst_24 = arith.constant dense<0.000000e+00> : vector<16x512xf32>
    %93 = tpu.matmul %91, %92, %cst_24 {dimension_numbers = #tpu.dot_dimension_numbers<[1], [0], [0], [1], [0, 0, 1, 1], [], []>} : vector<16x96xf32>, vector<96x512xf32>, vector<16x512xf32> -> vector<16x512xf32>
    %c96_25 = arith.constant 96 : index
    %c0_26 = arith.constant 0 : index
    %94 = vector.load %arg3[%c96_25, %c0_26] : memref<97x800xf32, #tpu.memory_space<vmem>>, vector<1x512xf32>
    %95 = vector.broadcast %94 : vector<1x512xf32> to vector<16x512xf32>
    %96 = arith.addf %93, %95 : vector<16x512xf32>
    %cst_27 = arith.constant 0.000000e+00 : f32
    %97 = vector.broadcast %cst_27 : f32 to vector<16x512xf32>
    %98 = arith.maximumf %96, %97 : vector<16x512xf32>
    %c128 = arith.constant 128 : index
    %c0_28 = arith.constant 0 : index
    %99 = vector.load %arg2[%c128, %c0_28] : memref<646x96xf32, #tpu.memory_space<vmem>>, vector<512x96xf32>
    %cst_29 = arith.constant dense<0.000000e+00> : vector<16x96xf32>
    %100 = tpu.matmul %98, %99, %cst_29 {dimension_numbers = #tpu.dot_dimension_numbers<[1], [0], [0], [1], [0, 0, 1, 1], [], []>} : vector<16x512xf32>, vector<512x96xf32>, vector<16x96xf32> -> vector<16x96xf32>
    %c645 = arith.constant 645 : index
    %c0_30 = arith.constant 0 : index
    %101 = vector.load %arg2[%c645, %c0_30] : memref<646x96xf32, #tpu.memory_space<vmem>>, vector<1x96xf32>
    %102 = vector.broadcast %101 : vector<1x96xf32> to vector<16x96xf32>
    %103 = arith.addf %100, %102 : vector<16x96xf32>
    %104 = arith.addf %91, %103 : vector<16x96xf32>
    %c643 = arith.constant 643 : index
    %c0_31 = arith.constant 0 : index
    %105 = vector.load %arg2[%c643, %c0_31] : memref<646x96xf32, #tpu.memory_space<vmem>>, vector<1x96xf32>
    %c644 = arith.constant 644 : index
    %c0_32 = arith.constant 0 : index
    %106 = vector.load %arg2[%c644, %c0_32] : memref<646x96xf32, #tpu.memory_space<vmem>>, vector<1x96xf32>
    %cst_33 = arith.constant dense<0.000000e+00> : vector<16xf32>
    %107 = vector.multi_reduction <add>, %104, %cst_33 [1] : vector<16x96xf32> to vector<16xf32>
    %108 = vector.shape_cast %107 : vector<16xf32> to vector<16x1xf32>
    %cst_34 = arith.constant 9.600000e+01 : f32
    %109 = vector.broadcast %cst_34 : f32 to vector<16x1xf32>
    %110 = arith.divf %108, %109 : vector<16x1xf32>
    %111 = vector.broadcast %110 : vector<16x1xf32> to vector<16x96xf32>
    %112 = arith.subf %104, %111 : vector<16x96xf32>
    %113 = arith.mulf %112, %112 : vector<16x96xf32>
    %cst_35 = arith.constant dense<0.000000e+00> : vector<16xf32>
    %114 = vector.multi_reduction <add>, %113, %cst_35 [1] : vector<16x96xf32> to vector<16xf32>
    %115 = vector.shape_cast %114 : vector<16xf32> to vector<16x1xf32>
    %cst_36 = arith.constant 9.600000e+01 : f32
    %116 = vector.broadcast %cst_36 : f32 to vector<16x1xf32>
    %117 = arith.divf %115, %116 : vector<16x1xf32>
    %118 = vector.broadcast %110 : vector<16x1xf32> to vector<16x96xf32>
    %119 = arith.subf %104, %118 : vector<16x96xf32>
    %cst_37 = arith.constant 9.99999974E-6 : f32
    %120 = vector.broadcast %cst_37 : f32 to vector<16x1xf32>
    %121 = arith.addf %117, %120 : vector<16x1xf32>
    %122 = math.rsqrt %121 : vector<16x1xf32>
    %123 = vector.broadcast %122 : vector<16x1xf32> to vector<16x96xf32>
    %124 = arith.mulf %119, %123 : vector<16x96xf32>
    %125 = vector.broadcast %105 : vector<1x96xf32> to vector<16x96xf32>
    %126 = arith.mulf %124, %125 : vector<16x96xf32>
    %127 = vector.broadcast %106 : vector<1x96xf32> to vector<16x96xf32>
    %128 = arith.addf %126, %127 : vector<16x96xf32>
    %129 = vector.extract_strided_slice %128 {offsets = [0, 0], sizes = [8, 96], strides = [1, 1]} : vector<16x96xf32> to vector<8x96xf32>
    %cst_38 = arith.constant dense<0.000000e+00> : vector<96xf32>
    %130 = vector.multi_reduction <add>, %129, %cst_38 [0] : vector<8x96xf32> to vector<96xf32>
    %131 = vector.shape_cast %130 : vector<96xf32> to vector<1x96xf32>
    %cst_39 = arith.constant 8.000000e+00 : f32
    %132 = vector.broadcast %cst_39 : f32 to vector<1x96xf32>
    %133 = arith.divf %131, %132 : vector<1x96xf32>
    %134 = vector.extract_strided_slice %128 {offsets = [8, 0], sizes = [8, 96], strides = [1, 1]} : vector<16x96xf32> to vector<8x96xf32>
    %cst_40 = arith.constant dense<0.000000e+00> : vector<96xf32>
    %135 = vector.multi_reduction <add>, %134, %cst_40 [0] : vector<8x96xf32> to vector<96xf32>
    %136 = vector.shape_cast %135 : vector<96xf32> to vector<1x96xf32>
    %cst_41 = arith.constant 8.000000e+00 : f32
    %137 = vector.broadcast %cst_41 : f32 to vector<1x96xf32>
    %138 = arith.divf %136, %137 : vector<1x96xf32>
    %139 = tpu.concatenate %133, %138 in 0 : vector<1x96xf32>, vector<1x96xf32> -> vector<2x96xf32>
    %c0_42 = arith.constant 0 : index
    %c0_43 = arith.constant 0 : index
    %140 = vector.load %arg4[%c0_42, %c0_43] : memref<97x32xf32, #tpu.memory_space<vmem>>, vector<96x32xf32>
    %cst_44 = arith.constant dense<0.000000e+00> : vector<2x32xf32>
    %141 = tpu.matmul %139, %140, %cst_44 {dimension_numbers = #tpu.dot_dimension_numbers<[1], [0], [0], [1], [0, 0, 1, 1], [], []>} : vector<2x96xf32>, vector<96x32xf32>, vector<2x32xf32> -> vector<2x32xf32>
    %c96_45 = arith.constant 96 : index
    %c0_46 = arith.constant 0 : index
    %142 = vector.load %arg4[%c96_45, %c0_46] : memref<97x32xf32, #tpu.memory_space<vmem>>, vector<1x32xf32>
    %143 = vector.broadcast %142 : vector<1x32xf32> to vector<2x32xf32>
    %144 = arith.addf %141, %143 : vector<2x32xf32>
    %cst_47 = arith.constant dense<0xFF800000> : vector<2xf32>
    %145 = vector.multi_reduction <maximumf>, %144, %cst_47 [1] : vector<2x32xf32> to vector<2xf32>
    %146 = vector.shape_cast %145 : vector<2xf32> to vector<2x1xf32>
    %147 = vector.broadcast %146 : vector<2x1xf32> to vector<2x32xf32>
    %148 = arith.subf %144, %147 : vector<2x32xf32>
    %149 = math.exp %148 : vector<2x32xf32>
    %cst_48 = arith.constant dense<0.000000e+00> : vector<2xf32>
    %150 = vector.multi_reduction <add>, %149, %cst_48 [1] : vector<2x32xf32> to vector<2xf32>
    %151 = vector.shape_cast %150 : vector<2xf32> to vector<2x1xf32>
    %152 = vector.broadcast %151 : vector<2x1xf32> to vector<2x32xf32>
    %153 = arith.divf %149, %152 : vector<2x32xf32>
    %c0_49 = arith.constant 0 : index
    %c0_50 = arith.constant 0 : index
    %154 = vector.load %arg5[%c0_49, %c0_50] : memref<2x32xf32, #tpu.memory_space<vmem>>, vector<2x32xf32>
    tpu.vector_store %arg5[%c0_49, %c0_50], %153 {strides = array<i32>} : memref<2x32xf32, #tpu.memory_space<vmem>>, vector<2x32xf32>,
    return
  }
}

</mosaic_0001>

<llo_original>
// kernel: tpu_custom_call.1
$region0: #{tpu_custom_call.1}
  #allocation0 [shape = 'u32[]', space=smem, size = 0x4, offset = 0x4, fixed_abs, tag = 'smem constant byte address 0x4 - core index']
  #allocation1 [shape = 'u32[72,128]{1,0:T(1,128)}', space=vmem, size = 0x9000, scoped, tag = 'internal scratch']
  %s0 = inlined_call_operand.vmem [shape: s32[16,1], index: 0, kind: input, shape index: {}]
  %s1 = inlined_call_operand.vmem [shape: f32[128,128], index: 1, kind: input, shape index: {}]
  %s2 = inlined_call_operand.vmem [shape: f32[646,96], index: 2, kind: input, shape index: {}]
  %s3 = inlined_call_operand.vmem [shape: f32[97,800], index: 3, kind: input, shape index: {}]
  %s4 = inlined_call_operand.vmem [shape: f32[97,32], index: 4, kind: input, shape index: {}]
  %s5 = inlined_call_operand.hbm [shape: f32[2,32], index: 5, kind: output, shape index: {}]
  %s6 = sld [smem:[#allocation0]]
  $region30: #{tpu_custom_call.1} parent=0
    _
  %s8 = ssub.s32 1, %s6
  %s9 = scalar_select 0, %s8, %s6
  $region1: #{tpu_custom_call.1} parent=0
    #allocation2 [shape = 'u8[1024]{0}', space=vmem, size = 0x400, scoped, tag = 'output window, operand 0, single buffered']
    #allocation3 [shape = 's32[1]{0}', space=sflag, size = 0x4, scoped, tag = 'scoped memory for tpu_custom_call.1']
    %10 = vsyncpa [#allocation3], 0
    // Predicated region
    $region2: #{tpu_custom_call.1} parent=1 // pred_check
      _
    $region3: #{tpu_custom_call.1} parent=1 // pred_check_branch
      %12 = sbr.rel (0) target = $region5
    $region4: #{tpu_custom_call.1} parent=1 // pred_region
      _
    $region5: #{tpu_custom_call.1} parent=1 // pred_fallthru
      _
    // Predicated region
    $region6: #{tpu_custom_call.1} parent=1 // pred_check
      _
    $region7: #{tpu_custom_call.1} parent=1 // pred_check_branch
      %14 = sbr.rel (0) target = $region9
    $region8: #{tpu_custom_call.1} parent=1 // pred_region
      _
    $region9: #{tpu_custom_call.1} parent=1 // pred_fallthru
      _
    // Predicated region
    $region10: #{tpu_custom_call.1} parent=1 // pred_check
      _
    $region11: #{tpu_custom_call.1} parent=1 // pred_check_branch
      %16 = sbr.rel (0) target = $region13
    $region12: #{tpu_custom_call.1} parent=1 // pred_region
      _
    $region13: #{tpu_custom_call.1} parent=1 // pred_fallthru
      _
    // Predicated region
    $region14: #{tpu_custom_call.1} parent=1 // pred_check
      _
    $region15: #{tpu_custom_call.1} parent=1 // pred_check_branch
      %18 = sbr.rel (0) target = $region17
    $region16: #{tpu_custom_call.1} parent=1 // pred_region
      _
    $region17: #{tpu_custom_call.1} parent=1 // pred_fallthru
      _
    // Predicated region
    $region18: #{tpu_custom_call.1} parent=1 // pred_check
      _
    $region19: #{tpu_custom_call.1} parent=1 // pred_check_branch
      %20 = sbr.rel (0) target = $region21
    $region20: #{tpu_custom_call.1} parent=1 // pred_region
      _
    $region21: #{tpu_custom_call.1} parent=1 // pred_fallthru
      _
    %v21 = vld [vmem:[%s0] sm:$0xff]
    %v22 = vld [vmem:[%s0 + $0x8] sm:$0xff]
    %v23 = vlaneseq
    %v24 = vand.u32 %v23, 127
    %25 = vset.pattern.permute.xlu0 0
    %26 = vperm.xlu0 %25, %v21
    %v27 = vpop.permute.xlu0 %26
    %28 = vset.pattern.permute.xlu0 0
    %29 = vperm.xlu0 %28, %v22
    %v30 = vpop.permute.xlu0 %29
    %vm31 = vcmp.eq.s32.totalorder %v27, %v24
    %vm32 = vcmp.eq.s32.totalorder %v30, %v24
    %v33 = vsel %vm31, 1, 0
    %v34 = vsel %vm32, 1, 0
    %v35 = vcvt.s32.f32 %v33
    %v36 = vcvt.s32.f32 %v34
    %v37 = vld [vmem:[%s2] sm:$0xff]
    %v38 = vld [vmem:[%s2 + $0x8] sm:$0xff]
    %v39 = vld [vmem:[%s2 + $0x10] sm:$0xff]
    %v40 = vld [vmem:[%s2 + $0x18] sm:$0xff]
    %vm41 = vcmask 261120
    %v43 = vsel %vm41, %v35, 0
    %v46 = vsel %vm41, %v36, 0
    %48 = vmatpush.msra.mxu0 0.0
    %49 = vmatpush.msra.mxu0 0.0
    %50 = vmatpush.msra.mxu0 0.0
    %51 = vmatpush.msra.mxu0 0.0
    %52 = vmatpush.msra.mxu0 0.0
    %53 = vmatpush.msra.mxu0 0.0
    %54 = vmatpush.msra.mxu0 0.0
    %55 = vmatpush.msra.mxu0 0.0
    %56 = vmatpush.msra.mxu0 0.0
    %57 = vmatpush.msra.mxu0 0.0
    %58 = vmatpush.msra.mxu0 0.0
    %59 = vmatpush.msra.mxu0 0.0
    %60 = vmatpush.msra.mxu0 %v40
    %61 = vmatpush.msra.mxu0 %v39
    %62 = vmatpush.msra.mxu0 %v38
    %63 = vmatpush.msra.mxu0 %v37
    %64 = vmatmul.f32.gmra.mxu0 %v43
    %v65 = vpop.f32.mrf.mxu0
    %v66 = vadd.f32 0.0, %v65
    %67 = vmatmul.f32.gmra.mxu0 %v46
    %v68 = vpop.f32.mrf.mxu0
    %v69 = vadd.f32 0.0, %v68
    %70 = vdwg.mxu0
    %v71 = vld [vmem:[%s3 + $0x20] sm:$0xff]
    %v72 = vld [vmem:[%s3 + $0x28] sm:$0xff]
    %v73 = vld [vmem:[%s3 + $0x30] sm:$0xff]
    %v74 = vld [vmem:[%s3 + $0x58] sm:$0xff]
    %v75 = vld [vmem:[%s3 + $0x60] sm:$0xff]
    %v76 = vld [vmem:[%s3 + $0x68] sm:$0xff]
    %v77 = vld [vmem:[%s3 + $0x90] sm:$0xff]
    %v78 = vld [vmem:[%s3 + $0x98] sm:$0xff]
    %v79 = vld [vmem:[%s3 + $0xa0] sm:$0xff]
    %v80 = vld [vmem:[%s3 + $0xc8] sm:$0xff]
    %v81 = vld [vmem:[%s3 + $0xd0] sm:$0xff]
    %v82 = vld [vmem:[%s3 + $0xd8] sm:$0xff]
    %v83 = vld [vmem:[%s3 + $0x100] sm:$0xff]
    %v84 = vld [vmem:[%s3 + $0x108] sm:$0xff]
    %v85 = vld [vmem:[%s3 + $0x110] sm:$0xff]
    %v86 = vld [vmem:[%s3 + $0x138] sm:$0xff]
    %v87 = vld [vmem:[%s3 + $0x140] sm:$0xff]
    %v88 = vld [vmem:[%s3 + $0x148] sm:$0xff]
    %v89 = vld [vmem:[%s3 + $0x170] sm:$0xff]
    %v90 = vld [vmem:[%s3 + $0x178] sm:$0xff]
    %v91 = vld [vmem:[%s3 + $0x180] sm:$0xff]
    %v92 = vld [vmem:[%s3 + $0x1a8] sm:$0xff]
    %v93 = vld [vmem:[%s3 + $0x1b0] sm:$0xff]
    %v94 = vld [vmem:[%s3 + $0x1b8] sm:$0xff]
    %v95 = vld [vmem:[%s3 + $0x1e0] sm:$0xff]
    %v96 = vld [vmem:[%s3 + $0x1e8] sm:$0xff]
    %v97 = vld [vmem:[%s3 + $0x1f0] sm:$0xff]
    %v98 = vld [vmem:[%s3 + $0x218] sm:$0xff]
    %v99 = vld [vmem:[%s3 + $0x220] sm:$0xff]
    %v100 = vld [vmem:[%s3 + $0x228] sm:$0xff]
    %v101 = vld [vmem:[%s3 + $0x250] sm:$0xff]
    %v102 = vld [vmem:[%s3 + $0x258] sm:$0xff]
    %v103 = vld [vmem:[%s3 + $0x260] sm:$0xff]
    %v104 = vld [vmem:[%s3 + $0x288] sm:$0xff]
    %v105 = vld [vmem:[%s3 + $0x290] sm:$0xff]
    %v106 = vld [vmem:[%s3 + $0x298] sm:$0xff]
    %s107 = scalar_lea.vmem %s3, 704
    %v108 = vld [vmem:[%s107] ss:$8 sm:$0x7]
    %v110 = vperm.slane %v108, 0
    %v111 = vperm.slane %v108, 1
    %v112 = vperm.slane %v108, 2
    %vm116 = vcmask 785408
    %v118 = vsel %vm116, %v66, 0
    %v121 = vsel %vm116, %v69, 0
    %123 = vmatpush.msra.mxu0 0.0
    %124 = vmatpush.msra.mxu0 0.0
    %125 = vmatpush.msra.mxu0 0.0
    %126 = vmatpush.msra.mxu0 0.0
    %127 = vmatpush.msra.mxu0 %v104
    %128 = vmatpush.msra.mxu0 %v101
    %129 = vmatpush.msra.mxu0 %v98
    %130 = vmatpush.msra.mxu0 %v95
    %131 = vmatpush.msra.mxu0 %v92
    %132 = vmatpush.msra.mxu0 %v89
    %133 = vmatpush.msra.mxu0 %v86
    %134 = vmatpush.msra.mxu0 %v83
    %135 = vmatpush.msra.mxu0 %v80
    %136 = vmatpush.msra.mxu0 %v77
    %137 = vmatpush.msra.mxu0 %v74
    %138 = vmatpush.msra.mxu0 %v71
    %139 = vmatmul.f32.gmra.mxu0 %v118
    %v140 = vpop.f32.mrf.mxu0
    %v141 = vadd.f32 %v110, %v140
    %142 = vmatmul.f32.gmra.mxu0 %v121
    %v143 = vpop.f32.mrf.mxu0
    %v144 = vadd.f32 %v110, %v143
    %145 = vdwg.mxu0
    %146 = vmatpush.msra.mxu0 0.0
    %147 = vmatpush.msra.mxu0 0.0
    %148 = vmatpush.msra.mxu0 0.0
    %149 = vmatpush.msra.mxu0 0.0
    %150 = vmatpush.msra.mxu0 %v105
    %151 = vmatpush.msra.mxu0 %v102
    %152 = vmatpush.msra.mxu0 %v99
    %153 = vmatpush.msra.mxu0 %v96
    %154 = vmatpush.msra.mxu0 %v93
    %155 = vmatpush.msra.mxu0 %v90
    %156 = vmatpush.msra.mxu0 %v87
    %157 = vmatpush.msra.mxu0 %v84
    %158 = vmatpush.msra.mxu0 %v81
    %159 = vmatpush.msra.mxu0 %v78
    %160 = vmatpush.msra.mxu0 %v75
    %161 = vmatpush.msra.mxu0 %v72
    %162 = vmatmul.f32.gmra.mxu0 %v118
    %v163 = vpop.f32.mrf.mxu0
    %v164 = vadd.f32 %v111, %v163
    %165 = vmatmul.f32.gmra.mxu0 %v121
    %v166 = vpop.f32.mrf.mxu0
    %v167 = vadd.f32 %v111, %v166
    %168 = vdwg.mxu0
    %169 = vmatpush.msra.mxu0 0.0
    %170 = vmatpush.msra.mxu0 0.0
    %171 = vmatpush.msra.mxu0 0.0
    %172 = vmatpush.msra.mxu0 0.0
    %173 = vmatpush.msra.mxu0 %v106
    %174 = vmatpush.msra.mxu0 %v103
    %175 = vmatpush.msra.mxu0 %v100
    %176 = vmatpush.msra.mxu0 %v97
    %177 = vmatpush.msra.mxu0 %v94
    %178 = vmatpush.msra.mxu0 %v91
    %179 = vmatpush.msra.mxu0 %v88
    %180 = vmatpush.msra.mxu0 %v85
    %181 = vmatpush.msra.mxu0 %v82
    %182 = vmatpush.msra.mxu0 %v79
    %183 = vmatpush.msra.mxu0 %v76
    %184 = vmatpush.msra.mxu0 %v73
    %185 = vmatmul.f32.gmra.mxu0 %v118
    %v186 = vpop.f32.mrf.mxu0
    %v187 = vadd.f32 %v112, %v186
    %188 = vmatmul.f32.gmra.mxu0 %v121
    %v189 = vpop.f32.mrf.mxu0
    %v190 = vadd.f32 %v112, %v189
    %191 = vdwg.mxu0
    %194 = vrot.lane.b32.xlu0 %v141, 116
    %v195 = vpop.permute.xlu0 %194
    %196 = vrot.lane.b32.xlu0 %v144, 116
    %v197 = vpop.permute.xlu0 %196
    %198 = vrot.lane.b32.xlu0 %v141, 104
    %v199 = vpop.permute.xlu0 %198
    %200 = vrot.lane.b32.xlu0 %v144, 104
    %v201 = vpop.permute.xlu0 %200
    %202 = vrot.lane.b32.xlu0 %v141, 92
    %v203 = vpop.permute.xlu0 %202
    %204 = vrot.lane.b32.xlu0 %v144, 92
    %v205 = vpop.permute.xlu0 %204
    %206 = vrot.lane.b32.xlu0 %v141, 80
    %v207 = vpop.permute.xlu0 %206
    %208 = vrot.lane.b32.xlu0 %v144, 80
    %v209 = vpop.permute.xlu0 %208
    %210 = vrot.lane.b32.xlu0 %v141, 68
    %v211 = vpop.permute.xlu0 %210
    %212 = vrot.lane.b32.xlu0 %v144, 68
    %v213 = vpop.permute.xlu0 %212
    %214 = vrot.lane.b32.xlu0 %v141, 56
    %v215 = vpop.permute.xlu0 %214
    %216 = vrot.lane.b32.xlu0 %v144, 56
    %v217 = vpop.permute.xlu0 %216
    %218 = vrot.lane.b32.xlu0 %v141, 44
    %v219 = vpop.permute.xlu0 %218
    %220 = vrot.lane.b32.xlu0 %v144, 44
    %v221 = vpop.permute.xlu0 %220
    %224 = vrot.lane.b32.xlu0 %v164, 104
    %v225 = vpop.permute.xlu0 %224
    %226 = vrot.lane.b32.xlu0 %v167, 104
    %v227 = vpop.permute.xlu0 %226
    %vm228 = vcmask 850944
    %v229 = vsel %vm228, %v199, %v225
    %v230 = vsel %vm228, %v201, %v227
    %231 = vrot.lane.b32.xlu0 %v164, 92
    %v232 = vpop.permute.xlu0 %231
    %233 = vrot.lane.b32.xlu0 %v167, 92
    %v234 = vpop.permute.xlu0 %233
    %235 = vrot.lane.b32.xlu0 %v164, 80
    %v236 = vpop.permute.xlu0 %235
    %237 = vrot.lane.b32.xlu0 %v167, 80
    %v238 = vpop.permute.xlu0 %237
    %239 = vrot.lane.b32.xlu0 %v164, 68
    %v240 = vpop.permute.xlu0 %239
    %241 = vrot.lane.b32.xlu0 %v167, 68
    %v242 = vpop.permute.xlu0 %241
    %243 = vrot.lane.b32.xlu0 %v164, 56
    %v244 = vpop.permute.xlu0 %243
    %245 = vrot.lane.b32.xlu0 %v167, 56
    %v246 = vpop.permute.xlu0 %245
    %247 = vrot.lane.b32.xlu0 %v164, 44
    %v248 = vpop.permute.xlu0 %247
    %249 = vrot.lane.b32.xlu0 %v167, 44
    %v250 = vpop.permute.xlu0 %249
    %251 = vrot.lane.b32.xlu0 %v164, 116
    %v252 = vpop.permute.xlu0 %251
    %253 = vrot.lane.b32.xlu0 %v167, 116
    %v254 = vpop.permute.xlu0 %253
    %257 = vrot.lane.b32.xlu0 %v187, 68
    %v258 = vpop.permute.xlu0 %257
    %259 = vrot.lane.b32.xlu0 %v190, 68
    %v260 = vpop.permute.xlu0 %259
    %vm261 = vcmask 556032
    %v262 = vsel %vm261, %v240, %v258
    %v263 = vsel %vm261, %v242, %v260
    %264 = vrot.lane.b32.xlu0 %v187, 56
    %v265 = vpop.permute.xlu0 %264
    %266 = vrot.lane.b32.xlu0 %v190, 56
    %v267 = vpop.permute.xlu0 %266
    %268 = vrot.lane.b32.xlu0 %v187, 44
    %v269 = vpop.permute.xlu0 %268
    %270 = vrot.lane.b32.xlu0 %v190, 44
    %v271 = vpop.permute.xlu0 %270
    %v272 = vld [vmem:[%s1] sm:$0xff]
    %v273 = vld [vmem:[%s1 + $0x8] sm:$0xff]
    %v274 = vld [vmem:[%s1 + $0x10] sm:$0xff]
    %v275 = vld [vmem:[%s1 + $0x18] sm:$0xff]
    %v276 = vld [vmem:[%s1 + $0x20] sm:$0xff]
    %v277 = vld [vmem:[%s1 + $0x28] sm:$0xff]
    %v278 = vld [vmem:[%s1 + $0x30] sm:$0xff]
    %v279 = vld [vmem:[%s1 + $0x38] sm:$0xff]
    %v280 = vld [vmem:[%s1 + $0x40] sm:$0xff]
    %v281 = vld [vmem:[%s1 + $0x48] sm:$0xff]
    %v282 = vld [vmem:[%s1 + $0x50] sm:$0xff]
    %v283 = vld [vmem:[%s1 + $0x58] sm:$0xff]
    %v284 = vld [vmem:[%s1 + $0x60] sm:$0xff]
    %v285 = vld [vmem:[%s1 + $0x68] sm:$0xff]
    %v286 = vld [vmem:[%s1 + $0x70] sm:$0xff]
    %v287 = vld [vmem:[%s1 + $0x78] sm:$0xff]
    %288 = vrot.lane.b32.xlu0 %v141, 32
    %v289 = vpop.permute.xlu0 %288
    %290 = vrot.lane.b32.xlu0 %v144, 32
    %v291 = vpop.permute.xlu0 %290
    %292 = vrot.lane.b32.xlu0 %v195, 32
    %v293 = vpop.permute.xlu0 %292
    %294 = vrot.lane.b32.xlu0 %v197, 32
    %v295 = vpop.permute.xlu0 %294
    %296 = vrot.lane.b32.xlu0 %v229, 32
    %v297 = vpop.permute.xlu0 %296
    %298 = vrot.lane.b32.xlu0 %v230, 32
    %v299 = vpop.permute.xlu0 %298
    %300 = vrot.lane.b32.xlu0 %v232, 32
    %v301 = vpop.permute.xlu0 %300
    %302 = vrot.lane.b32.xlu0 %v234, 32
    %v303 = vpop.permute.xlu0 %302
    %304 = vrot.lane.b32.xlu0 %v236, 32
    %v305 = vpop.permute.xlu0 %304
    %306 = vrot.lane.b32.xlu0 %v238, 32
    %v307 = vpop.permute.xlu0 %306
    %308 = vrot.lane.b32.xlu0 %v240, 32
    %v309 = vpop.permute.xlu0 %308
    %310 = vrot.lane.b32.xlu0 %v242, 32
    %v311 = vpop.permute.xlu0 %310
    %312 = vrot.lane.b32.xlu0 %v244, 32
    %v313 = vpop.permute.xlu0 %312
    %314 = vrot.lane.b32.xlu0 %v246, 32
    %v315 = vpop.permute.xlu0 %314
    %316 = vrot.lane.b32.xlu0 %v248, 32
    %v317 = vpop.permute.xlu0 %316
    %318 = vrot.lane.b32.xlu0 %v250, 32
    %v319 = vpop.permute.xlu0 %318
    %vm320 = vcmask 97280
    %v321 = vsel %vm320, %v141, 0
    %v323 = vsel %vm320, %v144, 0
    %v325 = vsel %vm320, %v195, 0
    %v327 = vsel %vm320, %v197, 0
    %v329 = vsel %vm320, %v199, 0
    %v331 = vsel %vm320, %v201, 0
    %v333 = vsel %vm320, %v203, 0
    %v335 = vsel %vm320, %v205, 0
    %v337 = vsel %vm320, %v207, 0
    %v339 = vsel %vm320, %v209, 0
    %v341 = vsel %vm320, %v211, 0
    %v343 = vsel %vm320, %v213, 0
    %v345 = vsel %vm320, %v215, 0
    %v347 = vsel %vm320, %v217, 0
    %v349 = vsel %vm320, %v219, 0
    %v351 = vsel %vm320, %v221, 0
    %v353 = vsel %vm320, %v289, 0
    %v355 = vsel %vm320, %v291, 0
    %v357 = vsel %vm320, %v293, 0
    %v359 = vsel %vm320, %v295, 0
    %v361 = vsel %vm320, %v297, 0
    %v363 = vsel %vm320, %v299, 0
    %v365 = vsel %vm320, %v301, 0
    %v367 = vsel %vm320, %v303, 0
    %v369 = vsel %vm320, %v305, 0
    %v371 = vsel %vm320, %v307, 0
    %v373 = vsel %vm320, %v309, 0
    %v375 = vsel %vm320, %v311, 0
    %v377 = vsel %vm320, %v313, 0
    %v379 = vsel %vm320, %v315, 0
    %v381 = vsel %vm320, %v317, 0
    %v383 = vsel %vm320, %v319, 0
    %385 = vmatpush.xpose.msra.mxu0 %v383
    %386 = vmatpush.xpose.msra.mxu0 %v381
    %387 = vmatpush.xpose.msra.mxu0 %v379
    %388 = vmatpush.xpose.msra.mxu0 %v377
    %389 = vmatpush.xpose.msra.mxu0 %v375
    %390 = vmatpush.xpose.msra.mxu0 %v373
    %391 = vmatpush.xpose.msra.mxu0 %v371
    %392 = vmatpush.xpose.msra.mxu0 %v369
    %393 = vmatpush.xpose.msra.mxu0 %v367
    %394 = vmatpush.xpose.msra.mxu0 %v365
    %395 = vmatpush.xpose.msra.mxu0 %v363
    %396 = vmatpush.xpose.msra.mxu0 %v361
    %397 = vmatpush.xpose.msra.mxu0 %v359
    %398 = vmatpush.xpose.msra.mxu0 %v357
    %399 = vmatpush.xpose.msra.mxu0 %v355
    %400 = vmatpush.xpose.msra.mxu0 %v353
    %401 = vmatmul.f32.gmra.mxu0 %v321
    %v402 = vpop.f32.mrf.mxu0
    %v403 = vadd.f32 %v272, %v402
    %404 = vmatmul.f32.gmra.mxu0 %v323
    %v405 = vpop.f32.mrf.mxu0
    %v406 = vadd.f32 %v273, %v405
    %407 = vmatmul.f32.gmra.mxu0 %v325
    %v408 = vpop.f32.mrf.mxu0
    %v409 = vadd.f32 %v274, %v408
    %410 = vmatmul.f32.gmra.mxu0 %v327
    %v411 = vpop.f32.mrf.mxu0
    %v412 = vadd.f32 %v275, %v411
    %413 = vmatmul.f32.gmra.mxu0 %v329
    %v414 = vpop.f32.mrf.mxu0
    %v415 = vadd.f32 %v276, %v414
    %416 = vmatmul.f32.gmra.mxu0 %v331
    %v417 = vpop.f32.mrf.mxu0
    %v418 = vadd.f32 %v277, %v417
    %419 = vmatmul.f32.gmra.mxu0 %v333
    %v420 = vpop.f32.mrf.mxu0
    %v421 = vadd.f32 %v278, %v420
    %422 = vmatmul.f32.gmra.mxu0 %v335
    %v423 = vpop.f32.mrf.mxu0
    %v424 = vadd.f32 %v279, %v423
    %425 = vmatmul.f32.gmra.mxu0 %v337
    %v426 = vpop.f32.mrf.mxu0
    %v427 = vadd.f32 %v280, %v426
    %428 = vmatmul.f32.gmra.mxu0 %v339
    %v429 = vpop.f32.mrf.mxu0
    %v430 = vadd.f32 %v281, %v429
    %431 = vmatmul.f32.gmra.mxu0 %v341
    %v432 = vpop.f32.mrf.mxu0
    %v433 = vadd.f32 %v282, %v432
    %434 = vmatmul.f32.gmra.mxu0 %v343
    %v435 = vpop.f32.mrf.mxu0
    %v436 = vadd.f32 %v283, %v435
    %437 = vmatmul.f32.gmra.mxu0 %v345
    %v438 = vpop.f32.mrf.mxu0
    %v439 = vadd.f32 %v284, %v438
    %440 = vmatmul.f32.gmra.mxu0 %v347
    %v441 = vpop.f32.mrf.mxu0
    %v442 = vadd.f32 %v285, %v441
    %443 = vmatmul.f32.gmra.mxu0 %v349
    %v444 = vpop.f32.mrf.mxu0
    %v445 = vadd.f32 %v286, %v444
    %446 = vmatmul.f32.gmra.mxu0 %v351
    %v447 = vpop.f32.mrf.mxu0
    %v448 = vadd.f32 %v287, %v447
    %449 = vdwg.mxu0
    %450 = vmax.xlane.f32.xlu0 %v403
    %v451 = vpop.xlane.xlu0 %450
    %452 = vmax.xlane.f32.xlu0 %v406
    %v453 = vpop.xlane.xlu0 %452
    %454 = vmax.xlane.f32.xlu0 %v409
    %v455 = vpop.xlane.xlu0 %454
    %456 = vmax.xlane.f32.xlu0 %v412
    %v457 = vpop.xlane.xlu0 %456
    %458 = vmax.xlane.f32.xlu0 %v415
    %v459 = vpop.xlane.xlu0 %458
    %460 = vmax.xlane.f32.xlu0 %v418
    %v461 = vpop.xlane.xlu0 %460
    %462 = vmax.xlane.f32.xlu0 %v421
    %v463 = vpop.xlane.xlu0 %462
    %464 = vmax.xlane.f32.xlu0 %v424
    %v465 = vpop.xlane.xlu0 %464
    %466 = vmax.xlane.f32.xlu0 %v427
    %v467 = vpop.xlane.xlu0 %466
    %468 = vmax.xlane.f32.xlu0 %v430
    %v469 = vpop.xlane.xlu0 %468
    %470 = vmax.xlane.f32.xlu0 %v433
    %v471 = vpop.xlane.xlu0 %470
    %472 = vmax.xlane.f32.xlu0 %v436
    %v473 = vpop.xlane.xlu0 %472
    %474 = vmax.xlane.f32.xlu0 %v439
    %v475 = vpop.xlane.xlu0 %474
    %476 = vmax.xlane.f32.xlu0 %v442
    %v477 = vpop.xlane.xlu0 %476
    %478 = vmax.xlane.f32.xlu0 %v445
    %v479 = vpop.xlane.xlu0 %478
    %480 = vmax.xlane.f32.xlu0 %v448
    %v481 = vpop.xlane.xlu0 %480
    %v482 = vsub.f32 %v403, %v451
    %v483 = vsub.f32 %v406, %v453
    %v484 = vsub.f32 %v409, %v455
    %v485 = vsub.f32 %v412, %v457
    %v486 = vsub.f32 %v415, %v459
    %v487 = vsub.f32 %v418, %v461
    %v488 = vsub.f32 %v421, %v463
    %v489 = vsub.f32 %v424, %v465
    %v490 = vsub.f32 %v427, %v467
    %v491 = vsub.f32 %v430, %v469
    %v492 = vsub.f32 %v433, %v471
    %v493 = vsub.f32 %v436, %v473
    %v494 = vsub.f32 %v439, %v475
    %v495 = vsub.f32 %v442, %v477
    %v496 = vsub.f32 %v445, %v479
    %v497 = vsub.f32 %v448, %v481
    %v498 = vmul.f32 %v482, 1.442695
    %v499 = vpow.pop %v498
    %v500 = vmul.f32 %v483, 1.442695
    %v501 = vpow.pop %v500
    %v502 = vmul.f32 %v484, 1.442695
    %v503 = vpow.pop %v502
    %v504 = vmul.f32 %v485, 1.442695
    %v505 = vpow.pop %v504
    %v506 = vmul.f32 %v486, 1.442695
    %v507 = vpow.pop %v506
    %v508 = vmul.f32 %v487, 1.442695
    %v509 = vpow.pop %v508
    %v510 = vmul.f32 %v488, 1.442695
    %v511 = vpow.pop %v510
    %v512 = vmul.f32 %v489, 1.442695
    %v513 = vpow.pop %v512
    %v514 = vmul.f32 %v490, 1.442695
    %v515 = vpow.pop %v514
    %v516 = vmul.f32 %v491, 1.442695
    %v517 = vpow.pop %v516
    %v518 = vmul.f32 %v492, 1.442695
    %v519 = vpow.pop %v518
    %v520 = vmul.f32 %v493, 1.442695
    %v521 = vpow.pop %v520
    %v522 = vmul.f32 %v494, 1.442695
    %v523 = vpow.pop %v522
    %v524 = vmul.f32 %v495, 1.442695
    %v525 = vpow.pop %v524
    %v526 = vmul.f32 %v496, 1.442695
    %v527 = vpow.pop %v526
    %v528 = vmul.f32 %v497, 1.442695
    %v529 = vpow.pop %v528
    %530 = vadd.xlane.f32.xlu0 %v499
    %v531 = vpop.xlane.xlu0 %530
    %532 = vadd.xlane.f32.xlu0 %v501
    %v533 = vpop.xlane.xlu0 %532
    %534 = vadd.xlane.f32.xlu0 %v503
    %v535 = vpop.xlane.xlu0 %534
    %536 = vadd.xlane.f32.xlu0 %v505
    %v537 = vpop.xlane.xlu0 %536
    %538 = vadd.xlane.f32.xlu0 %v507
    %v539 = vpop.xlane.xlu0 %538
    %540 = vadd.xlane.f32.xlu0 %v509
    %v541 = vpop.xlane.xlu0 %540
    %542 = vadd.xlane.f32.xlu0 %v511
    %v543 = vpop.xlane.xlu0 %542
    %544 = vadd.xlane.f32.xlu0 %v513
    %v545 = vpop.xlane.xlu0 %544
    %546 = vadd.xlane.f32.xlu0 %v515
    %v547 = vpop.xlane.xlu0 %546
    %548 = vadd.xlane.f32.xlu0 %v517
    %v549 = vpop.xlane.xlu0 %548
    %550 = vadd.xlane.f32.xlu0 %v519
    %v551 = vpop.xlane.xlu0 %550
    %552 = vadd.xlane.f32.xlu0 %v521
    %v553 = vpop.xlane.xlu0 %552
    %554 = vadd.xlane.f32.xlu0 %v523
    %v555 = vpop.xlane.xlu0 %554
    %556 = vadd.xlane.f32.xlu0 %v525
    %v557 = vpop.xlane.xlu0 %556
    %558 = vadd.xlane.f32.xlu0 %v527
    %v559 = vpop.xlane.xlu0 %558
    %560 = vadd.xlane.f32.xlu0 %v529
    %v561 = vpop.xlane.xlu0 %560
    %v562 = vrcp.pop %v531
    %v563 = vmul.f32 %v531, %v562
    %v564 = vsub.f32 1.0, %v563
    %v565 = vmul.f32 %v562, %v564
    %v566 = vadd.f32 %v562, %v565
    %vm567 = vweird.f32 %v531
    %vm568 = vweird.f32 %v562
    %vm569 = vmor %vm567, %vm568
    %v570 = vsel %vm569, %v562, %v566
    %v571 = vand.u32 2147483647, %v531
    %vm572 = vcmp.eq.f32.partialorder %v571, 8.507059e+37
    %v573 = vand.u32 %v531, 2147483648
    %v574 = vor.u32 1.1754944e-38, %v573
    %v575 = vsel %vm572, %v574, %v570
    %v576 = vmul.f32 %v499, %v575
    %v577 = vrcp.pop %v533
    %v578 = vmul.f32 %v533, %v577
    %v579 = vsub.f32 1.0, %v578
    %v580 = vmul.f32 %v577, %v579
    %v581 = vadd.f32 %v577, %v580
    %vm582 = vweird.f32 %v533
    %vm583 = vweird.f32 %v577
    %vm584 = vmor %vm582, %vm583
    %v585 = vsel %vm584, %v577, %v581
    %v586 = vand.u32 2147483647, %v533
    %vm587 = vcmp.eq.f32.partialorder %v586, 8.507059e+37
    %v588 = vand.u32 %v533, 2147483648
    %v589 = vor.u32 1.1754944e-38, %v588
    %v590 = vsel %vm587, %v589, %v585
    %v591 = vmul.f32 %v501, %v590
    %v592 = vrcp.pop %v535
    %v593 = vmul.f32 %v535, %v592
    %v594 = vsub.f32 1.0, %v593
    %v595 = vmul.f32 %v592, %v594
    %v596 = vadd.f32 %v592, %v595
    %vm597 = vweird.f32 %v535
    %vm598 = vweird.f32 %v592
    %vm599 = vmor %vm597, %vm598
    %v600 = vsel %vm599, %v592, %v596
    %v601 = vand.u32 2147483647, %v535
    %vm602 = vcmp.eq.f32.partialorder %v601, 8.507059e+37
    %v603 = vand.u32 %v535, 2147483648
    %v604 = vor.u32 1.1754944e-38, %v603
    %v605 = vsel %vm602, %v604, %v600
    %v606 = vmul.f32 %v503, %v605
    %v607 = vrcp.pop %v537
    %v608 = vmul.f32 %v537, %v607
    %v609 = vsub.f32 1.0, %v608
    %v610 = vmul.f32 %v607, %v609
    %v611 = vadd.f32 %v607, %v610
    %vm612 = vweird.f32 %v537
    %vm613 = vweird.f32 %v607
    %vm614 = vmor %vm612, %vm613
    %v615 = vsel %vm614, %v607, %v611
    %v616 = vand.u32 2147483647, %v537
    %vm617 = vcmp.eq.f32.partialorder %v616, 8.507059e+37
    %v618 = vand.u32 %v537, 2147483648
    %v619 = vor.u32 1.1754944e-38, %v618
    %v620 = vsel %vm617, %v619, %v615
    %v621 = vmul.f32 %v505, %v620
    %v622 = vrcp.pop %v539
    %v623 = vmul.f32 %v539, %v622
    %v624 = vsub.f32 1.0, %v623
    %v625 = vmul.f32 %v622, %v624
    %v626 = vadd.f32 %v622, %v625
    %vm627 = vweird.f32 %v539
    %vm628 = vweird.f32 %v622
    %vm629 = vmor %vm627, %vm628
    %v630 = vsel %vm629, %v622, %v626
    %v631 = vand.u32 2147483647, %v539
    %vm632 = vcmp.eq.f32.partialorder %v631, 8.507059e+37
    %v633 = vand.u32 %v539, 2147483648
    %v634 = vor.u32 1.1754944e-38, %v633
    %v635 = vsel %vm632, %v634, %v630
    %v636 = vmul.f32 %v507, %v635
    %v637 = vrcp.pop %v541
    %v638 = vmul.f32 %v541, %v637
    %v639 = vsub.f32 1.0, %v638
    %v640 = vmul.f32 %v637, %v639
    %v641 = vadd.f32 %v637, %v640
    %vm642 = vweird.f32 %v541
    %vm643 = vweird.f32 %v637
    %vm644 = vmor %vm642, %vm643
    %v645 = vsel %vm644, %v637, %v641
    %v646 = vand.u32 2147483647, %v541
    %vm647 = vcmp.eq.f32.partialorder %v646, 8.507059e+37
    %v648 = vand.u32 %v541, 2147483648
    %v649 = vor.u32 1.1754944e-38, %v648
    %v650 = vsel %vm647, %v649, %v645
    %v651 = vmul.f32 %v509, %v650
    %v652 = vrcp.pop %v543
    %v653 = vmul.f32 %v543, %v652
    %v654 = vsub.f32 1.0, %v653
    %v655 = vmul.f32 %v652, %v654
    %v656 = vadd.f32 %v652, %v655
    %vm657 = vweird.f32 %v543
    %vm658 = vweird.f32 %v652
    %vm659 = vmor %vm657, %vm658
    %v660 = vsel %vm659, %v652, %v656
    %v661 = vand.u32 2147483647, %v543
    %vm662 = vcmp.eq.f32.partialorder %v661, 8.507059e+37
    %v663 = vand.u32 %v543, 2147483648
    %v664 = vor.u32 1.1754944e-38, %v663
    %v665 = vsel %vm662, %v664, %v660
    %v666 = vmul.f32 %v511, %v665
    %v667 = vrcp.pop %v545
    %v668 = vmul.f32 %v545, %v667
    %v669 = vsub.f32 1.0, %v668
    %v670 = vmul.f32 %v667, %v669
    %v671 = vadd.f32 %v667, %v670
    %vm672 = vweird.f32 %v545
    %vm673 = vweird.f32 %v667
    %vm674 = vmor %vm672, %vm673
    %v675 = vsel %vm674, %v667, %v671
    %v676 = vand.u32 2147483647, %v545
    %vm677 = vcmp.eq.f32.partialorder %v676, 8.507059e+37
    %v678 = vand.u32 %v545, 2147483648
    %v679 = vor.u32 1.1754944e-38, %v678
    %v680 = vsel %vm677, %v679, %v675
    %v681 = vmul.f32 %v513, %v680
    %v682 = vrcp.pop %v547
    %v683 = vmul.f32 %v547, %v682
    %v684 = vsub.f32 1.0, %v683
    %v685 = vmul.f32 %v682, %v684
    %v686 = vadd.f32 %v682, %v685
    %vm687 = vweird.f32 %v547
    %vm688 = vweird.f32 %v682
    %vm689 = vmor %vm687, %vm688
    %v690 = vsel %vm689, %v682, %v686
    %v691 = vand.u32 2147483647, %v547
    %vm692 = vcmp.eq.f32.partialorder %v691, 8.507059e+37
    %v693 = vand.u32 %v547, 2147483648
    %v694 = vor.u32 1.1754944e-38, %v693
    %v695 = vsel %vm692, %v694, %v690
    %v696 = vmul.f32 %v515, %v695
    %v697 = vrcp.pop %v549
    %v698 = vmul.f32 %v549, %v697
    %v699 = vsub.f32 1.0, %v698
    %v700 = vmul.f32 %v697, %v699
    %v701 = vadd.f32 %v697, %v700
    %vm702 = vweird.f32 %v549
    %vm703 = vweird.f32 %v697
    %vm704 = vmor %vm702, %vm703
    %v705 = vsel %vm704, %v697, %v701
    %v706 = vand.u32 2147483647, %v549
    %vm707 = vcmp.eq.f32.partialorder %v706, 8.507059e+37
    %v708 = vand.u32 %v549, 2147483648
    %v709 = vor.u32 1.1754944e-38, %v708
    %v710 = vsel %vm707, %v709, %v705
    %v711 = vmul.f32 %v517, %v710
    %v712 = vrcp.pop %v551
    %v713 = vmul.f32 %v551, %v712
    %v714 = vsub.f32 1.0, %v713
    %v715 = vmul.f32 %v712, %v714
    %v716 = vadd.f32 %v712, %v715
    %vm717 = vweird.f32 %v551
    %vm718 = vweird.f32 %v712
    %vm719 = vmor %vm717, %vm718
    %v720 = vsel %vm719, %v712, %v716
    %v721 = vand.u32 2147483647, %v551
    %vm722 = vcmp.eq.f32.partialorder %v721, 8.507059e+37
    %v723 = vand.u32 %v551, 2147483648
    %v724 = vor.u32 1.1754944e-38, %v723
    %v725 = vsel %vm722, %v724, %v720
    %v726 = vmul.f32 %v519, %v725
    %v727 = vrcp.pop %v553
    %v728 = vmul.f32 %v553, %v727
    %v729 = vsub.f32 1.0, %v728
    %v730 = vmul.f32 %v727, %v729
    %v731 = vadd.f32 %v727, %v730
    %vm732 = vweird.f32 %v553
    %vm733 = vweird.f32 %v727
    %vm734 = vmor %vm732, %vm733
    %v735 = vsel %vm734, %v727, %v731
    %v736 = vand.u32 2147483647, %v553
    %vm737 = vcmp.eq.f32.partialorder %v736, 8.507059e+37
    %v738 = vand.u32 %v553, 2147483648
    %v739 = vor.u32 1.1754944e-38, %v738
    %v740 = vsel %vm737, %v739, %v735
    %v741 = vmul.f32 %v521, %v740
    %v742 = vrcp.pop %v555
    %v743 = vmul.f32 %v555, %v742
    %v744 = vsub.f32 1.0, %v743
    %v745 = vmul.f32 %v742, %v744
    %v746 = vadd.f32 %v742, %v745
    %vm747 = vweird.f32 %v555
    %vm748 = vweird.f32 %v742
    %vm749 = vmor %vm747, %vm748
    %v750 = vsel %vm749, %v742, %v746
    %v751 = vand.u32 2147483647, %v555
    %vm752 = vcmp.eq.f32.partialorder %v751, 8.507059e+37
    %v753 = vand.u32 %v555, 2147483648
    %v754 = vor.u32 1.1754944e-38, %v753
    %v755 = vsel %vm752, %v754, %v750
    %v756 = vmul.f32 %v523, %v755
    %v757 = vrcp.pop %v557
    %v758 = vmul.f32 %v557, %v757
    %v759 = vsub.f32 1.0, %v758
    %v760 = vmul.f32 %v757, %v759
    %v761 = vadd.f32 %v757, %v760
    %vm762 = vweird.f32 %v557
    %vm763 = vweird.f32 %v757
    %vm764 = vmor %vm762, %vm763
    %v765 = vsel %vm764, %v757, %v761
    %v766 = vand.u32 2147483647, %v557
    %vm767 = vcmp.eq.f32.partialorder %v766, 8.507059e+37
    %v768 = vand.u32 %v557, 2147483648
    %v769 = vor.u32 1.1754944e-38, %v768
    %v770 = vsel %vm767, %v769, %v765
    %v771 = vmul.f32 %v525, %v770
    %v772 = vrcp.pop %v559
    %v773 = vmul.f32 %v559, %v772
    %v774 = vsub.f32 1.0, %v773
    %v775 = vmul.f32 %v772, %v774
    %v776 = vadd.f32 %v772, %v775
    %vm777 = vweird.f32 %v559
    %vm778 = vweird.f32 %v772
    %vm779 = vmor %vm777, %vm778
    %v780 = vsel %vm779, %v772, %v776
    %v781 = vand.u32 2147483647, %v559
    %vm782 = vcmp.eq.f32.partialorder %v781, 8.507059e+37
    %v783 = vand.u32 %v559, 2147483648
    %v784 = vor.u32 1.1754944e-38, %v783
    %v785 = vsel %vm782, %v784, %v780
    %v786 = vmul.f32 %v527, %v785
    %v787 = vrcp.pop %v561
    %v788 = vmul.f32 %v561, %v787
    %v789 = vsub.f32 1.0, %v788
    %v790 = vmul.f32 %v787, %v789
    %v791 = vadd.f32 %v787, %v790
    %vm792 = vweird.f32 %v561
    %vm793 = vweird.f32 %v787
    %vm794 = vmor %vm792, %vm793
    %v795 = vsel %vm794, %v787, %v791
    %v796 = vand.u32 2147483647, %v561
    %vm797 = vcmp.eq.f32.partialorder %v796, 8.507059e+37
    %v798 = vand.u32 %v561, 2147483648
    %v799 = vor.u32 1.1754944e-38, %v798
    %v800 = vsel %vm797, %v799, %v795
    %v801 = vmul.f32 %v529, %v800
    %802 = vrot.lane.b32.xlu0 %v164, 64
    %v803 = vpop.permute.xlu0 %802
    %804 = vrot.lane.b32.xlu0 %v167, 64
    %v805 = vpop.permute.xlu0 %804
    %806 = vrot.lane.b32.xlu0 %v252, 64
    %v807 = vpop.permute.xlu0 %806
    %808 = vrot.lane.b32.xlu0 %v254, 64
    %v809 = vpop.permute.xlu0 %808
    %810 = vrot.lane.b32.xlu0 %v225, 64
    %v811 = vpop.permute.xlu0 %810
    %812 = vrot.lane.b32.xlu0 %v227, 64
    %v813 = vpop.permute.xlu0 %812
    %814 = vrot.lane.b32.xlu0 %v232, 64
    %v815 = vpop.permute.xlu0 %814
    %816 = vrot.lane.b32.xlu0 %v234, 64
    %v817 = vpop.permute.xlu0 %816
    %818 = vrot.lane.b32.xlu0 %v236, 64
    %v819 = vpop.permute.xlu0 %818
    %820 = vrot.lane.b32.xlu0 %v238, 64
    %v821 = vpop.permute.xlu0 %820
    %822 = vrot.lane.b32.xlu0 %v262, 64
    %v823 = vpop.permute.xlu0 %822
    %824 = vrot.lane.b32.xlu0 %v263, 64
    %v825 = vpop.permute.xlu0 %824
    %826 = vrot.lane.b32.xlu0 %v265, 64
    %v827 = vpop.permute.xlu0 %826
    %828 = vrot.lane.b32.xlu0 %v267, 64
    %v829 = vpop.permute.xlu0 %828
    %830 = vrot.lane.b32.xlu0 %v269, 64
    %v831 = vpop.permute.xlu0 %830
    %832 = vrot.lane.b32.xlu0 %v271, 64
    %v833 = vpop.permute.xlu0 %832
    %850 = vmatpush.msra.mxu0 %v833
    %851 = vmatpush.msra.mxu0 %v831
    %852 = vmatpush.msra.mxu0 %v829
    %853 = vmatpush.msra.mxu0 %v827
    %854 = vmatpush.msra.mxu0 %v825
    %855 = vmatpush.msra.mxu0 %v823
    %856 = vmatpush.msra.mxu0 %v821
    %857 = vmatpush.msra.mxu0 %v819
    %858 = vmatpush.msra.mxu0 %v817
    %859 = vmatpush.msra.mxu0 %v815
    %860 = vmatpush.msra.mxu0 %v813
    %861 = vmatpush.msra.mxu0 %v811
    %862 = vmatpush.msra.mxu0 %v809
    %863 = vmatpush.msra.mxu0 %v807
    %864 = vmatpush.msra.mxu0 %v805
    %865 = vmatpush.msra.mxu0 %v803
    %866 = vmatmul.f32.gmra.mxu0 %v576
    %v867 = vpop.f32.mrf.mxu0
    %v868 = vadd.f32 0.0, %v867
    %869 = vmatmul.f32.gmra.mxu0 %v591
    %v870 = vpop.f32.mrf.mxu0
    %v871 = vadd.f32 0.0, %v870
    %872 = vmatmul.f32.gmra.mxu0 %v606
    %v873 = vpop.f32.mrf.mxu0
    %v874 = vadd.f32 0.0, %v873
    %875 = vmatmul.f32.gmra.mxu0 %v621
    %v876 = vpop.f32.mrf.mxu0
    %v877 = vadd.f32 0.0, %v876
    %878 = vmatmul.f32.gmra.mxu0 %v636
    %v879 = vpop.f32.mrf.mxu0
    %v880 = vadd.f32 0.0, %v879
    %881 = vmatmul.f32.gmra.mxu0 %v651
    %v882 = vpop.f32.mrf.mxu0
    %v883 = vadd.f32 0.0, %v882
    %884 = vmatmul.f32.gmra.mxu0 %v666
    %v885 = vpop.f32.mrf.mxu0
    %v886 = vadd.f32 0.0, %v885
    %887 = vmatmul.f32.gmra.mxu0 %v681
    %v888 = vpop.f32.mrf.mxu0
    %v889 = vadd.f32 0.0, %v888
    %890 = vmatmul.f32.gmra.mxu0 %v696
    %v891 = vpop.f32.mrf.mxu0
    %v892 = vadd.f32 0.0, %v891
    %893 = vmatmul.f32.gmra.mxu0 %v711
    %v894 = vpop.f32.mrf.mxu0
    %v895 = vadd.f32 0.0, %v894
    %896 = vmatmul.f32.gmra.mxu0 %v726
    %v897 = vpop.f32.mrf.mxu0
    %v898 = vadd.f32 0.0, %v897
    %899 = vmatmul.f32.gmra.mxu0 %v741
    %v900 = vpop.f32.mrf.mxu0
    %v901 = vadd.f32 0.0, %v900
    %902 = vmatmul.f32.gmra.mxu0 %v756
    %v903 = vpop.f32.mrf.mxu0
    %v904 = vadd.f32 0.0, %v903
    %905 = vmatmul.f32.gmra.mxu0 %v771
    %v906 = vpop.f32.mrf.mxu0
    %v907 = vadd.f32 0.0, %v906
    %908 = vmatmul.f32.gmra.mxu0 %v786
    %v909 = vpop.f32.mrf.mxu0
    %v910 = vadd.f32 0.0, %v909
    %911 = vmatmul.f32.gmra.mxu0 %v801
    %v912 = vpop.f32.mrf.mxu0
    %v913 = vadd.f32 0.0, %v912
    %914 = vdwg.mxu0
    %917 = vrot.lane.b32.xlu0 %v874, 12
    %v918 = vpop.permute.xlu0 %917
    %919 = vrot.lane.b32.xlu0 %v877, 12
    %v920 = vpop.permute.xlu0 %919
    %925 = vrot.lane.b32.xlu0 %v880, 24
    %v926 = vpop.permute.xlu0 %925
    %927 = vrot.lane.b32.xlu0 %v883, 24
    %v928 = vpop.permute.xlu0 %927
    %933 = vrot.lane.b32.xlu0 %v886, 36
    %v934 = vpop.permute.xlu0 %933
    %935 = vrot.lane.b32.xlu0 %v889, 36
    %v936 = vpop.permute.xlu0 %935
    %941 = vrot.lane.b32.xlu0 %v892, 48
    %v942 = vpop.permute.xlu0 %941
    %943 = vrot.lane.b32.xlu0 %v895, 48
    %v944 = vpop.permute.xlu0 %943
    %949 = vrot.lane.b32.xlu0 %v898, 60
    %v950 = vpop.permute.xlu0 %949
    %951 = vrot.lane.b32.xlu0 %v901, 60
    %v952 = vpop.permute.xlu0 %951
    %957 = vrot.lane.b32.xlu0 %v904, 72
    %v958 = vpop.permute.xlu0 %957
    %959 = vrot.lane.b32.xlu0 %v907, 72
    %v960 = vpop.permute.xlu0 %959
    %965 = vrot.lane.b32.xlu0 %v910, 84
    %v966 = vpop.permute.xlu0 %965
    %967 = vrot.lane.b32.xlu0 %v913, 84
    %v968 = vpop.permute.xlu0 %967
    %v971 = vsel %vm320, %v868, %v918
    %v972 = vsel %vm320, %v871, %v920
    %vm973 = vcmask 195584
    %v974 = vsel %vm973, %v971, %v926
    %v975 = vsel %vm973, %v972, %v928
    %vm976 = vcmask 293888
    %v977 = vsel %vm976, %v974, %v934
    %v978 = vsel %vm976, %v975, %v936
    %vm979 = vcmask 392192
    %v980 = vsel %vm979, %v977, %v942
    %v981 = vsel %vm979, %v978, %v944
    %vm982 = vcmask 490496
    %v983 = vsel %vm982, %v980, %v950
    %v984 = vsel %vm982, %v981, %v952
    %vm985 = vcmask 588800
    %v986 = vsel %vm985, %v983, %v958
    %v987 = vsel %vm985, %v984, %v960
    %vm988 = vcmask 687104
    %v989 = vsel %vm988, %v986, %v966
    %v990 = vsel %vm988, %v987, %v968
    %v991 = vld [vmem:[%s2 + $0x20] sm:$0xff]
    %v992 = vld [vmem:[%s2 + $0x28] sm:$0xff]
    %v993 = vld [vmem:[%s2 + $0x30] sm:$0xff]
    %v994 = vld [vmem:[%s2 + $0x38] sm:$0xff]
    %v995 = vld [vmem:[%s2 + $0x40] sm:$0xff]
    %v996 = vld [vmem:[%s2 + $0x48] sm:$0xff]
    %v997 = vld [vmem:[%s2 + $0x50] sm:$0xff]
    %v998 = vld [vmem:[%s2 + $0x58] sm:$0xff]
    %v999 = vld [vmem:[%s2 + $0x60] sm:$0xff]
    %v1000 = vld [vmem:[%s2 + $0x68] sm:$0xff]
    %v1001 = vld [vmem:[%s2 + $0x70] sm:$0xff]
    %v1002 = vld [vmem:[%s2 + $0x78] sm:$0xff]
    %v1003 = vld [vmem:[%s2 + $0x280] sm:$0x1]
    %v1004 = vperm.slane %v1003, 0
    %v1006 = vsel %vm116, %v989, 0
    %v1009 = vsel %vm116, %v990, 0
    %1011 = vmatpush.msra.mxu0 0.0
    %1012 = vmatpush.msra.mxu0 0.0
    %1013 = vmatpush.msra.mxu0 0.0
    %1014 = vmatpush.msra.mxu0 0.0
    %1015 = vmatpush.msra.mxu0 %v1002
    %1016 = vmatpush.msra.mxu0 %v1001
    %1017 = vmatpush.msra.mxu0 %v1000
    %1018 = vmatpush.msra.mxu0 %v999
    %1019 = vmatpush.msra.mxu0 %v998
    %1020 = vmatpush.msra.mxu0 %v997
    %1021 = vmatpush.msra.mxu0 %v996
    %1022 = vmatpush.msra.mxu0 %v995
    %1023 = vmatpush.msra.mxu0 %v994
    %1024 = vmatpush.msra.mxu0 %v993
    %1025 = vmatpush.msra.mxu0 %v992
    %1026 = vmatpush.msra.mxu0 %v991
    %1027 = vmatmul.f32.gmra.mxu0 %v1006
    %v1028 = vpop.f32.mrf.mxu0
    %v1029 = vadd.f32 %v1004, %v1028
    %1030 = vmatmul.f32.gmra.mxu0 %v1009
    %v1031 = vpop.f32.mrf.mxu0
    %v1032 = vadd.f32 %v1004, %v1031
    %1033 = vdwg.mxu0
    %v1034 = vadd.f32 %v66, %v1029
    %v1035 = vadd.f32 %v69, %v1032
    %v1036 = vld [vmem:[%s2 + $0x281] sm:$0x1]
    %v1037 = vld [vmem:[%s2 + $0x282] sm:$0x1]
    %v1038 = vsel %vm116, %v1034, 0.0
    %1039 = vadd.xlane.f32.xlu0 %v1038
    %v1040 = vpop.xlane.xlu0 %1039
    %v1041 = vsel %vm116, %v1035, 0.0
    %1042 = vadd.xlane.f32.xlu0 %v1041
    %v1043 = vpop.xlane.xlu0 %1042
    %v1044 = vrcp.pop 96.0
    %v1045 = vmul.f32 96.0, %v1044
    %v1046 = vsub.f32 1.0, %v1045
    %v1047 = vmul.f32 %v1044, %v1046
    %v1048 = vadd.f32 %v1044, %v1047
    %vm1049 = vweird.f32 %v1044
    %v1050 = vsel %vm1049, %v1044, %v1048
    %v1051 = vmul.f32 %v1040, %v1050
    %v1052 = vmul.f32 %v1043, %v1050
    %v1053 = vsub.f32 %v1034, %v1051
    %v1054 = vsub.f32 %v1035, %v1052
    %v1055 = vmul.f32 %v1053, %v1053
    %v1056 = vmul.f32 %v1054, %v1054
    %v1057 = vsel %vm116, %v1055, 0.0
    %1058 = vadd.xlane.f32.xlu0 %v1057
    %v1059 = vpop.xlane.xlu0 %1058
    %v1060 = vsel %vm116, %v1056, 0.0
    %1061 = vadd.xlane.f32.xlu0 %v1060
    %v1062 = vpop.xlane.xlu0 %1061
    %v1063 = vmul.f32 %v1059, %v1050
    %v1064 = vmul.f32 %v1062, %v1050
    %v1065 = vadd.f32 %v1063, 1e-05
    %v1066 = vadd.f32 %v1064, 1e-05
    %v1067 = vrsqrt.pop %v1065
    %v1068 = vmul.f32 %v1067, %v1065
    %v1069 = vmul.f32 %v1068, %v1067
    %v1070 = vmul.f32 0.5, %v1069
    %v1071 = vsub.f32 1.5, %v1070
    %v1072 = vmul.f32 %v1067, %v1071
    %vm1073 = vweird.f32 %v1065
    %vm1074 = vweird.f32 %v1067
    %vm1075 = vmor %vm1073, %vm1074
    %v1076 = vsel %vm1075, %v1067, %v1072
    %v1077 = vrsqrt.pop %v1066
    %v1078 = vmul.f32 %v1077, %v1066
    %v1079 = vmul.f32 %v1078, %v1077
    %v1080 = vmul.f32 0.5, %v1079
    %v1081 = vsub.f32 1.5, %v1080
    %v1082 = vmul.f32 %v1077, %v1081
    %vm1083 = vweird.f32 %v1066
    %vm1084 = vweird.f32 %v1077
    %vm1085 = vmor %vm1083, %vm1084
    %v1086 = vsel %vm1085, %v1077, %v1082
    %v1087 = vmul.f32 %v1053, %v1076
    %v1088 = vmul.f32 %v1054, %v1086
    %v1089 = vperm.slane %v1036, 0
    %v1090 = vmul.f32 %v1087, %v1089
    %v1091 = vmul.f32 %v1088, %v1089
    %v1092 = vperm.slane %v1037, 0
    %v1093 = vadd.f32 %v1090, %v1092
    %v1094 = vadd.f32 %v1091, %v1092
    %v1095 = vld [vmem:[%s3] sm:$0xff]
    %v1096 = vld [vmem:[%s3 + $0x8] sm:$0xff]
    %v1097 = vld [vmem:[%s3 + $0x10] sm:$0xff]
    %v1098 = vld [vmem:[%s3 + $0x18] sm:$0xff]
    %v1099 = vld [vmem:[%s3 + $0x38] sm:$0xff]
    %v1100 = vld [vmem:[%s3 + $0x40] sm:$0xff]
    %v1101 = vld [vmem:[%s3 + $0x48] sm:$0xff]
    %v1102 = vld [vmem:[%s3 + $0x50] sm:$0xff]
    %v1103 = vld [vmem:[%s3 + $0x70] sm:$0xff]
    %v1104 = vld [vmem:[%s3 + $0x78] sm:$0xff]
    %v1105 = vld [vmem:[%s3 + $0x80] sm:$0xff]
    %v1106 = vld [vmem:[%s3 + $0x88] sm:$0xff]
    %v1107 = vld [vmem:[%s3 + $0xa8] sm:$0xff]
    %v1108 = vld [vmem:[%s3 + $0xb0] sm:$0xff]
    %v1109 = vld [vmem:[%s3 + $0xb8] sm:$0xff]
    %v1110 = vld [vmem:[%s3 + $0xc0] sm:$0xff]
    %v1111 = vld [vmem:[%s3 + $0xe0] sm:$0xff]
    %v1112 = vld [vmem:[%s3 + $0xe8] sm:$0xff]
    %v1113 = vld [vmem:[%s3 + $0xf0] sm:$0xff]
    %v1114 = vld [vmem:[%s3 + $0xf8] sm:$0xff]
    %v1115 = vld [vmem:[%s3 + $0x118] sm:$0xff]
    %v1116 = vld [vmem:[%s3 + $0x120] sm:$0xff]
    %v1117 = vld [vmem:[%s3 + $0x128] sm:$0xff]
    %v1118 = vld [vmem:[%s3 + $0x130] sm:$0xff]
    %v1119 = vld [vmem:[%s3 + $0x150] sm:$0xff]
    %v1120 = vld [vmem:[%s3 + $0x158] sm:$0xff]
    %v1121 = vld [vmem:[%s3 + $0x160] sm:$0xff]
    %v1122 = vld [vmem:[%s3 + $0x168] sm:$0xff]
    %v1123 = vld [vmem:[%s3 + $0x188] sm:$0xff]
    %v1124 = vld [vmem:[%s3 + $0x190] sm:$0xff]
    %v1125 = vld [vmem:[%s3 + $0x198] sm:$0xff]
    %v1126 = vld [vmem:[%s3 + $0x1a0] sm:$0xff]
    %v1127 = vld [vmem:[%s3 + $0x1c0] sm:$0xff]
    %v1128 = vld [vmem:[%s3 + $0x1c8] sm:$0xff]
    %v1129 = vld [vmem:[%s3 + $0x1d0] sm:$0xff]
    %v1130 = vld [vmem:[%s3 + $0x1d8] sm:$0xff]
    %v1131 = vld [vmem:[%s3 + $0x1f8] sm:$0xff]
    %v1132 = vld [vmem:[%s3 + $0x200] sm:$0xff]
    %v1133 = vld [vmem:[%s3 + $0x208] sm:$0xff]
    %v1134 = vld [vmem:[%s3 + $0x210] sm:$0xff]
    %v1135 = vld [vmem:[%s3 + $0x230] sm:$0xff]
    %v1136 = vld [vmem:[%s3 + $0x238] sm:$0xff]
    %v1137 = vld [vmem:[%s3 + $0x240] sm:$0xff]
    %v1138 = vld [vmem:[%s3 + $0x248] sm:$0xff]
    %v1139 = vld [vmem:[%s3 + $0x268] sm:$0xff]
    %v1140 = vld [vmem:[%s3 + $0x270] sm:$0xff]
    %v1141 = vld [vmem:[%s3 + $0x278] sm:$0xff]
    %v1142 = vld [vmem:[%s3 + $0x280] sm:$0xff]
    %s1143 = scalar_lea.vmem %s3, 672
    %v1144 = vld [vmem:[%s1143] ss:$8 sm:$0xf]
    %v1146 = vperm.slane %v1144, 0
    %v1147 = vperm.slane %v1144, 1
    %v1148 = vperm.slane %v1144, 2
    %v1149 = vperm.slane %v1144, 3
    %v1155 = vsel %vm116, %v1093, 0
    %v1158 = vsel %vm116, %v1094, 0
    %1160 = vmatpush.msra.mxu0 0.0
    %1161 = vmatpush.msra.mxu0 0.0
    %1162 = vmatpush.msra.mxu0 0.0
    %1163 = vmatpush.msra.mxu0 0.0
    %1164 = vmatpush.msra.mxu0 %v1139
    %1165 = vmatpush.msra.mxu0 %v1135
    %1166 = vmatpush.msra.mxu0 %v1131
    %1167 = vmatpush.msra.mxu0 %v1127
    %1168 = vmatpush.msra.mxu0 %v1123
    %1169 = vmatpush.msra.mxu0 %v1119
    %1170 = vmatpush.msra.mxu0 %v1115
    %1171 = vmatpush.msra.mxu0 %v1111
    %1172 = vmatpush.msra.mxu0 %v1107
    %1173 = vmatpush.msra.mxu0 %v1103
    %1174 = vmatpush.msra.mxu0 %v1099
    %1175 = vmatpush.msra.mxu0 %v1095
    %1176 = vmatmul.f32.gmra.mxu0 %v1155
    %v1177 = vpop.f32.mrf.mxu0
    %v1178 = vadd.f32 %v1146, %v1177
    %1179 = vmatmul.f32.gmra.mxu0 %v1158
    %v1180 = vpop.f32.mrf.mxu0
    %v1181 = vadd.f32 %v1146, %v1180
    %1182 = vdwg.mxu0
    %1183 = vmatpush.msra.mxu0 0.0
    %1184 = vmatpush.msra.mxu0 0.0
    %1185 = vmatpush.msra.mxu0 0.0
    %1186 = vmatpush.msra.mxu0 0.0
    %1187 = vmatpush.msra.mxu0 %v1140
    %1188 = vmatpush.msra.mxu0 %v1136
    %1189 = vmatpush.msra.mxu0 %v1132
    %1190 = vmatpush.msra.mxu0 %v1128
    %1191 = vmatpush.msra.mxu0 %v1124
    %1192 = vmatpush.msra.mxu0 %v1120
    %1193 = vmatpush.msra.mxu0 %v1116
    %1194 = vmatpush.msra.mxu0 %v1112
    %1195 = vmatpush.msra.mxu0 %v1108
    %1196 = vmatpush.msra.mxu0 %v1104
    %1197 = vmatpush.msra.mxu0 %v1100
    %1198 = vmatpush.msra.mxu0 %v1096
    %1199 = vmatmul.f32.gmra.mxu0 %v1155
    %v1200 = vpop.f32.mrf.mxu0
    %v1201 = vadd.f32 %v1147, %v1200
    %1202 = vmatmul.f32.gmra.mxu0 %v1158
    %v1203 = vpop.f32.mrf.mxu0
    %v1204 = vadd.f32 %v1147, %v1203
    %1205 = vdwg.mxu0
    %1206 = vmatpush.msra.mxu0 0.0
    %1207 = vmatpush.msra.mxu0 0.0
    %1208 = vmatpush.msra.mxu0 0.0
    %1209 = vmatpush.msra.mxu0 0.0
    %1210 = vmatpush.msra.mxu0 %v1141
    %1211 = vmatpush.msra.mxu0 %v1137
    %1212 = vmatpush.msra.mxu0 %v1133
    %1213 = vmatpush.msra.mxu0 %v1129
    %1214 = vmatpush.msra.mxu0 %v1125
    %1215 = vmatpush.msra.mxu0 %v1121
    %1216 = vmatpush.msra.mxu0 %v1117
    %1217 = vmatpush.msra.mxu0 %v1113
    %1218 = vmatpush.msra.mxu0 %v1109
    %1219 = vmatpush.msra.mxu0 %v1105
    %1220 = vmatpush.msra.mxu0 %v1101
    %1221 = vmatpush.msra.mxu0 %v1097
    %1222 = vmatmul.f32.gmra.mxu0 %v1155
    %v1223 = vpop.f32.mrf.mxu0
    %v1224 = vadd.f32 %v1148, %v1223
    %1225 = vmatmul.f32.gmra.mxu0 %v1158
    %v1226 = vpop.f32.mrf.mxu0
    %v1227 = vadd.f32 %v1148, %v1226
    %1228 = vdwg.mxu0
    %1229 = vmatpush.msra.mxu0 0.0
    %1230 = vmatpush.msra.mxu0 0.0
    %1231 = vmatpush.msra.mxu0 0.0
    %1232 = vmatpush.msra.mxu0 0.0
    %1233 = vmatpush.msra.mxu0 %v1142
    %1234 = vmatpush.msra.mxu0 %v1138
    %1235 = vmatpush.msra.mxu0 %v1134
    %1236 = vmatpush.msra.mxu0 %v1130
    %1237 = vmatpush.msra.mxu0 %v1126
    %1238 = vmatpush.msra.mxu0 %v1122
    %1239 = vmatpush.msra.mxu0 %v1118
    %1240 = vmatpush.msra.mxu0 %v1114
    %1241 = vmatpush.msra.mxu0 %v1110
    %1242 = vmatpush.msra.mxu0 %v1106
    %1243 = vmatpush.msra.mxu0 %v1102
    %1244 = vmatpush.msra.mxu0 %v1098
    %1245 = vmatmul.f32.gmra.mxu0 %v1155
    %v1246 = vpop.f32.mrf.mxu0
    %v1247 = vadd.f32 %v1149, %v1246
    %1248 = vmatmul.f32.gmra.mxu0 %v1158
    %v1249 = vpop.f32.mrf.mxu0
    %v1250 = vadd.f32 %v1149, %v1249
    %1251 = vdwg.mxu0
    %v1252 = vmax.f32 %v1178, 0.0
    %v1253 = vmax.f32 %v1201, 0.0
    %v1254 = vmax.f32 %v1224, 0.0
    %v1255 = vmax.f32 %v1247, 0.0
    %v1256 = vmax.f32 %v1181, 0.0
    %v1257 = vmax.f32 %v1204, 0.0
    %v1258 = vmax.f32 %v1227, 0.0
    %v1259 = vmax.f32 %v1250, 0.0
    %v1260 = vld [vmem:[%s2 + $0x80] sm:$0xff]
    %v1261 = vld [vmem:[%s2 + $0x88] sm:$0xff]
    %v1262 = vld [vmem:[%s2 + $0x90] sm:$0xff]
    %v1263 = vld [vmem:[%s2 + $0x98] sm:$0xff]
    %v1264 = vld [vmem:[%s2 + $0xa0] sm:$0xff]
    %v1265 = vld [vmem:[%s2 + $0xa8] sm:$0xff]
    %v1266 = vld [vmem:[%s2 + $0xb0] sm:$0xff]
    %v1267 = vld [vmem:[%s2 + $0xb8] sm:$0xff]
    %v1268 = vld [vmem:[%s2 + $0xc0] sm:$0xff]
    %v1269 = vld [vmem:[%s2 + $0xc8] sm:$0xff]
    %v1270 = vld [vmem:[%s2 + $0xd0] sm:$0xff]
    %v1271 = vld [vmem:[%s2 + $0xd8] sm:$0xff]
    %v1272 = vld [vmem:[%s2 + $0xe0] sm:$0xff]
    %v1273 = vld [vmem:[%s2 + $0xe8] sm:$0xff]
    %v1274 = vld [vmem:[%s2 + $0xf0] sm:$0xff]
    %v1275 = vld [vmem:[%s2 + $0xf8] sm:$0xff]
    %v1276 = vld [vmem:[%s2 + $0x100] sm:$0xff]
    %v1277 = vld [vmem:[%s2 + $0x108] sm:$0xff]
    %v1278 = vld [vmem:[%s2 + $0x110] sm:$0xff]
    %v1279 = vld [vmem:[%s2 + $0x118] sm:$0xff]
    %v1280 = vld [vmem:[%s2 + $0x120] sm:$0xff]
    %v1281 = vld [vmem:[%s2 + $0x128] sm:$0xff]
    %v1282 = vld [vmem:[%s2 + $0x130] sm:$0xff]
    %v1283 = vld [vmem:[%s2 + $0x138] sm:$0xff]
    %v1284 = vld [vmem:[%s2 + $0x140] sm:$0xff]
    %v1285 = vld [vmem:[%s2 + $0x148] sm:$0xff]
    %v1286 = vld [vmem:[%s2 + $0x150] sm:$0xff]
    %v1287 = vld [vmem:[%s2 + $0x158] sm:$0xff]
    %v1288 = vld [vmem:[%s2 + $0x160] sm:$0xff]
    %v1289 = vld [vmem:[%s2 + $0x168] sm:$0xff]
    %v1290 = vld [vmem:[%s2 + $0x170] sm:$0xff]
    %v1291 = vld [vmem:[%s2 + $0x178] sm:$0xff]
    %v1292 = vld [vmem:[%s2 + $0x180] sm:$0xff]
    %v1293 = vld [vmem:[%s2 + $0x188] sm:$0xff]
    %v1294 = vld [vmem:[%s2 + $0x190] sm:$0xff]
    %v1295 = vld [vmem:[%s2 + $0x198] sm:$0xff]
    %v1296 = vld [vmem:[%s2 + $0x1a0] sm:$0xff]
    %v1297 = vld [vmem:[%s2 + $0x1a8] sm:$0xff]
    %v1298 = vld [vmem:[%s2 + $0x1b0] sm:$0xff]
    %v1299 = vld [vmem:[%s2 + $0x1b8] sm:$0xff]
    %v1300 = vld [vmem:[%s2 + $0x1c0] sm:$0xff]
    %v1301 = vld [vmem:[%s2 + $0x1c8] sm:$0xff]
    %v1302 = vld [vmem:[%s2 + $0x1d0] sm:$0xff]
    %v1303 = vld [vmem:[%s2 + $0x1d8] sm:$0xff]
    %v1304 = vld [vmem:[%s2 + $0x1e0] sm:$0xff]
    %v1305 = vld [vmem:[%s2 + $0x1e8] sm:$0xff]
    %v1306 = vld [vmem:[%s2 + $0x1f0] sm:$0xff]
    %v1307 = vld [vmem:[%s2 + $0x1f8] sm:$0xff]
    %v1308 = vld [vmem:[%s2 + $0x200] sm:$0xff]
    %v1309 = vld [vmem:[%s2 + $0x208] sm:$0xff]
    %v1310 = vld [vmem:[%s2 + $0x210] sm:$0xff]
    %v1311 = vld [vmem:[%s2 + $0x218] sm:$0xff]
    %v1312 = vld [vmem:[%s2 + $0x220] sm:$0xff]
    %v1313 = vld [vmem:[%s2 + $0x228] sm:$0xff]
    %v1314 = vld [vmem:[%s2 + $0x230] sm:$0xff]
    %v1315 = vld [vmem:[%s2 + $0x238] sm:$0xff]
    %v1316 = vld [vmem:[%s2 + $0x240] sm:$0xff]
    %v1317 = vld [vmem:[%s2 + $0x248] sm:$0xff]
    %v1318 = vld [vmem:[%s2 + $0x250] sm:$0xff]
    %v1319 = vld [vmem:[%s2 + $0x258] sm:$0xff]
    %v1320 = vld [vmem:[%s2 + $0x260] sm:$0xff]
    %v1321 = vld [vmem:[%s2 + $0x268] sm:$0xff]
    %v1322 = vld [vmem:[%s2 + $0x270] sm:$0xff]
    %v1323 = vld [vmem:[%s2 + $0x278] sm:$0xff]
    %v1324 = vld [vmem:[%s2 + $0x285] sm:$0x1]
    %v1325 = vperm.slane %v1324, 0
    %1326 = vmatpush.msra.mxu0 %v1275
    %1327 = vmatpush.msra.mxu0 %v1274
    %1328 = vmatpush.msra.mxu0 %v1273
    %1329 = vmatpush.msra.mxu0 %v1272
    %1330 = vmatpush.msra.mxu0 %v1271
    %1331 = vmatpush.msra.mxu0 %v1270
    %1332 = vmatpush.msra.mxu0 %v1269
    %1333 = vmatpush.msra.mxu0 %v1268
    %1334 = vmatpush.msra.mxu0 %v1267
    %1335 = vmatpush.msra.mxu0 %v1266
    %1336 = vmatpush.msra.mxu0 %v1265
    %1337 = vmatpush.msra.mxu0 %v1264
    %1338 = vmatpush.msra.mxu0 %v1263
    %1339 = vmatpush.msra.mxu0 %v1262
    %1340 = vmatpush.msra.mxu0 %v1261
    %1341 = vmatpush.msra.mxu0 %v1260
    %1342 = vmatmul.f32.gmra.mxu0 %v1252
    %v1343 = vpop.f32.mrf.mxu0
    %v1344 = vadd.f32 %v1325, %v1343
    %1345 = vmatmul.f32.gmra.mxu0 %v1256
    %v1346 = vpop.f32.mrf.mxu0
    %v1347 = vadd.f32 %v1325, %v1346
    %1348 = vdwg.mxu0
    %1349 = vmatpush.msra.mxu0 %v1291
    %1350 = vmatpush.msra.mxu0 %v1290
    %1351 = vmatpush.msra.mxu0 %v1289
    %1352 = vmatpush.msra.mxu0 %v1288
    %1353 = vmatpush.msra.mxu0 %v1287
    %1354 = vmatpush.msra.mxu0 %v1286
    %1355 = vmatpush.msra.mxu0 %v1285
    %1356 = vmatpush.msra.mxu0 %v1284
    %1357 = vmatpush.msra.mxu0 %v1283
    %1358 = vmatpush.msra.mxu0 %v1282
    %1359 = vmatpush.msra.mxu0 %v1281
    %1360 = vmatpush.msra.mxu0 %v1280
    %1361 = vmatpush.msra.mxu0 %v1279
    %1362 = vmatpush.msra.mxu0 %v1278
    %1363 = vmatpush.msra.mxu0 %v1277
    %1364 = vmatpush.msra.mxu0 %v1276
    %1365 = vmatmul.f32.gmra.mxu0 %v1253
    %v1366 = vpop.f32.mrf.mxu0
    %v1367 = vadd.f32 %v1344, %v1366
    %1368 = vmatmul.f32.gmra.mxu0 %v1257
    %v1369 = vpop.f32.mrf.mxu0
    %v1370 = vadd.f32 %v1347, %v1369
    %1371 = vdwg.mxu0
    %1372 = vmatpush.msra.mxu0 %v1307
    %1373 = vmatpush.msra.mxu0 %v1306
    %1374 = vmatpush.msra.mxu0 %v1305
    %1375 = vmatpush.msra.mxu0 %v1304
    %1376 = vmatpush.msra.mxu0 %v1303
    %1377 = vmatpush.msra.mxu0 %v1302
    %1378 = vmatpush.msra.mxu0 %v1301
    %1379 = vmatpush.msra.mxu0 %v1300
    %1380 = vmatpush.msra.mxu0 %v1299
    %1381 = vmatpush.msra.mxu0 %v1298
    %1382 = vmatpush.msra.mxu0 %v1297
    %1383 = vmatpush.msra.mxu0 %v1296
    %1384 = vmatpush.msra.mxu0 %v1295
    %1385 = vmatpush.msra.mxu0 %v1294
    %1386 = vmatpush.msra.mxu0 %v1293
    %1387 = vmatpush.msra.mxu0 %v1292
    %1388 = vmatmul.f32.gmra.mxu0 %v1254
    %v1389 = vpop.f32.mrf.mxu0
    %v1390 = vadd.f32 %v1367, %v1389
    %1391 = vmatmul.f32.gmra.mxu0 %v1258
    %v1392 = vpop.f32.mrf.mxu0
    %v1393 = vadd.f32 %v1370, %v1392
    %1394 = vdwg.mxu0
    %1395 = vmatpush.msra.mxu0 %v1323
    %1396 = vmatpush.msra.mxu0 %v1322
    %1397 = vmatpush.msra.mxu0 %v1321
    %1398 = vmatpush.msra.mxu0 %v1320
    %1399 = vmatpush.msra.mxu0 %v1319
    %1400 = vmatpush.msra.mxu0 %v1318
    %1401 = vmatpush.msra.mxu0 %v1317
    %1402 = vmatpush.msra.mxu0 %v1316
    %1403 = vmatpush.msra.mxu0 %v1315
    %1404 = vmatpush.msra.mxu0 %v1314
    %1405 = vmatpush.msra.mxu0 %v1313
    %1406 = vmatpush.msra.mxu0 %v1312
    %1407 = vmatpush.msra.mxu0 %v1311
    %1408 = vmatpush.msra.mxu0 %v1310
    %1409 = vmatpush.msra.mxu0 %v1309
    %1410 = vmatpush.msra.mxu0 %v1308
    %1411 = vmatmul.f32.gmra.mxu0 %v1255
    %v1412 = vpop.f32.mrf.mxu0
    %v1413 = vadd.f32 %v1390, %v1412
    %1414 = vmatmul.f32.gmra.mxu0 %v1259
    %v1415 = vpop.f32.mrf.mxu0
    %v1416 = vadd.f32 %v1393, %v1415
    %1417 = vdwg.mxu0
    %v1418 = vadd.f32 %v1093, %v1413
    %v1419 = vadd.f32 %v1094, %v1416
    %v1420 = vld [vmem:[%s2 + $0x283] sm:$0x1]
    %v1421 = vld [vmem:[%s2 + $0x284] sm:$0x1]
    %v1422 = vsel %vm116, %v1418, 0.0
    %1423 = vadd.xlane.f32.xlu0 %v1422
    %v1424 = vpop.xlane.xlu0 %1423
    %v1425 = vsel %vm116, %v1419, 0.0
    %1426 = vadd.xlane.f32.xlu0 %v1425
    %v1427 = vpop.xlane.xlu0 %1426
    %v1428 = vmul.f32 %v1424, %v1050
    %v1429 = vmul.f32 %v1427, %v1050
    %v1430 = vsub.f32 %v1418, %v1428
    %v1431 = vsub.f32 %v1419, %v1429
    %v1432 = vmul.f32 %v1430, %v1430
    %v1433 = vmul.f32 %v1431, %v1431
    %v1434 = vsel %vm116, %v1432, 0.0
    %1435 = vadd.xlane.f32.xlu0 %v1434
    %v1436 = vpop.xlane.xlu0 %1435
    %v1437 = vsel %vm116, %v1433, 0.0
    %1438 = vadd.xlane.f32.xlu0 %v1437
    %v1439 = vpop.xlane.xlu0 %1438
    %v1440 = vmul.f32 %v1436, %v1050
    %v1441 = vmul.f32 %v1439, %v1050
    %v1442 = vadd.f32 %v1440, 1e-05
    %v1443 = vadd.f32 %v1441, 1e-05
    %v1444 = vrsqrt.pop %v1442
    %v1445 = vmul.f32 %v1444, %v1442
    %v1446 = vmul.f32 %v1445, %v1444
    %v1447 = vmul.f32 0.5, %v1446
    %v1448 = vsub.f32 1.5, %v1447
    %v1449 = vmul.f32 %v1444, %v1448
    %vm1450 = vweird.f32 %v1442
    %vm1451 = vweird.f32 %v1444
    %vm1452 = vmor %vm1450, %vm1451
    %v1453 = vsel %vm1452, %v1444, %v1449
    %v1454 = vrsqrt.pop %v1443
    %v1455 = vmul.f32 %v1454, %v1443
    %v1456 = vmul.f32 %v1455, %v1454
    %v1457 = vmul.f32 0.5, %v1456
    %v1458 = vsub.f32 1.5, %v1457
    %v1459 = vmul.f32 %v1454, %v1458
    %vm1460 = vweird.f32 %v1443
    %vm1461 = vweird.f32 %v1454
    %vm1462 = vmor %vm1460, %vm1461
    %v1463 = vsel %vm1462, %v1454, %v1459
    %v1464 = vmul.f32 %v1430, %v1453
    %v1465 = vmul.f32 %v1431, %v1463
    %v1466 = vperm.slane %v1420, 0
    %v1467 = vmul.f32 %v1464, %v1466
    %v1468 = vmul.f32 %v1465, %v1466
    %v1469 = vperm.slane %v1421, 0
    %v1470 = vadd.f32 %v1467, %v1469
    %v1471 = vadd.f32 %v1468, %v1469
    %v1472 = vsel %vm116, %v1470, 0.0
    %v1473 = vrot.slane %v1472, 4
    %v1474 = vadd.f32 %v1472, %v1473
    %v1475 = vrot.slane %v1474, 2
    %v1476 = vadd.f32 %v1474, %v1475
    %v1477 = vrot.slane %v1476, 1
    %v1478 = vadd.f32 %v1476, %v1477
    %v1479 = vrcp.pop 8.0
    %v1480 = vmul.f32 8.0, %v1479
    %v1481 = vsub.f32 1.0, %v1480
    %v1482 = vmul.f32 %v1479, %v1481
    %v1483 = vadd.f32 %v1479, %v1482
    %vm1484 = vweird.f32 %v1479
    %v1485 = vsel %vm1484, %v1479, %v1483
    %v1486 = vmul.f32 %v1478, %v1485
    %v1487 = vsel %vm116, %v1471, 0.0
    %v1488 = vrot.slane %v1487, 4
    %v1489 = vadd.f32 %v1487, %v1488
    %v1490 = vrot.slane %v1489, 2
    %v1491 = vadd.f32 %v1489, %v1490
    %v1492 = vrot.slane %v1491, 1
    %v1493 = vadd.f32 %v1491, %v1492
    %v1494 = vmul.f32 %v1493, %v1485
    %vm1495 = vcmask 1040384
    %v1496 = vsel %vm1495, %v1486, %v1494
    %v1497 = vld [vmem:[%s4] sm:$0xff]
    %v1498 = vld [vmem:[%s4 + $0x8] sm:$0xff]
    %v1499 = vld [vmem:[%s4 + $0x10] sm:$0xff]
    %v1500 = vld [vmem:[%s4 + $0x18] sm:$0xff]
    %v1501 = vld [vmem:[%s4 + $0x20] sm:$0xff]
    %v1502 = vld [vmem:[%s4 + $0x28] sm:$0xff]
    %v1503 = vld [vmem:[%s4 + $0x30] sm:$0xff]
    %v1504 = vld [vmem:[%s4 + $0x38] sm:$0xff]
    %v1505 = vld [vmem:[%s4 + $0x40] sm:$0xff]
    %v1506 = vld [vmem:[%s4 + $0x48] sm:$0xff]
    %v1507 = vld [vmem:[%s4 + $0x50] sm:$0xff]
    %v1508 = vld [vmem:[%s4 + $0x58] sm:$0xff]
    %v1509 = vld [vmem:[%s4 + $0x60] sm:$0x1]
    %v1510 = vperm.slane %v1509, 0
    %v1512 = vsel %vm116, %v1496, 0
    %1514 = vmatpush.msra.mxu0 0.0
    %1515 = vmatpush.msra.mxu0 0.0
    %1516 = vmatpush.msra.mxu0 0.0
    %1517 = vmatpush.msra.mxu0 0.0
    %1518 = vmatpush.msra.mxu0 %v1508
    %1519 = vmatpush.msra.mxu0 %v1507
    %1520 = vmatpush.msra.mxu0 %v1506
    %1521 = vmatpush.msra.mxu0 %v1505
    %1522 = vmatpush.msra.mxu0 %v1504
    %1523 = vmatpush.msra.mxu0 %v1503
    %1524 = vmatpush.msra.mxu0 %v1502
    %1525 = vmatpush.msra.mxu0 %v1501
    %1526 = vmatpush.msra.mxu0 %v1500
    %1527 = vmatpush.msra.mxu0 %v1499
    %1528 = vmatpush.msra.mxu0 %v1498
    %1529 = vmatpush.msra.mxu0 %v1497
    %1530 = vmatmul.f32.gmra.mxu0 %v1512
    %v1531 = vpop.f32.mrf.mxu0
    %v1532 = vadd.f32 %v1510, %v1531
    %1533 = vdwg.mxu0
    %vm1534 = vcmask 254976
    %v1535 = vsel %vm1534, %v1532, -inf
    %1536 = vmax.xlane.f32.xlu0 %v1535
    %v1537 = vpop.xlane.xlu0 %1536
    %v1538 = vsub.f32 %v1532, %v1537
    %v1539 = vmul.f32 %v1538, 1.442695
    %v1540 = vpow.pop %v1539
    %v1541 = vsel %vm1534, %v1540, 0.0
    %1542 = vadd.xlane.f32.xlu0 %v1541
    %v1543 = vpop.xlane.xlu0 %1542
    %v1544 = vrcp.pop %v1543
    %v1545 = vmul.f32 %v1543, %v1544
    %v1546 = vsub.f32 1.0, %v1545
    %v1547 = vmul.f32 %v1544, %v1546
    %v1548 = vadd.f32 %v1544, %v1547
    %vm1549 = vweird.f32 %v1543
    %vm1550 = vweird.f32 %v1544
    %vm1551 = vmor %vm1549, %vm1550
    %v1552 = vsel %vm1551, %v1544, %v1548
    %v1553 = vand.u32 2147483647, %v1543
    %vm1554 = vcmp.eq.f32.partialorder %v1553, 8.507059e+37
    %v1555 = vand.u32 %v1543, 2147483648
    %v1556 = vor.u32 1.1754944e-38, %v1555
    %v1557 = vsel %vm1554, %v1556, %v1552
    %v1558 = vmul.f32 %v1540, %v1557
    %1559 = vst.msk [vmem:[#allocation2] sm:$0x3] %vm1534, %v1558
    // Predicated region
    $region22: #{tpu_custom_call.1} parent=1 // pred_check
      _
    $region23: #{tpu_custom_call.1} parent=1 // pred_check_branch
      %1561 = sbr.rel (0) target = $region25
    $region24: #{tpu_custom_call.1} parent=1 // pred_region
      %1563 = vsyncadd [#allocation3], 0
      %s1565 = sshll.u32 [#allocation2], 4
      %s1566 = int_to_ptr.vmem [resolvable:$true] %s1565
      %s1567 = sshll.u32 %s5, 4
      %s1568 = int_to_ptr.hbm [resolvable:$true] %s1567
      %1570 = dma.vmem_to_hbm [thread:$0]  %s1566, 32, %s1568, [#allocation3]
    $region25: #{tpu_custom_call.1} parent=1 // pred_fallthru
      _
    // Predicated region
    $region26: #{tpu_custom_call.1} parent=1 // pred_check
      _
    $region27: #{tpu_custom_call.1} parent=1 // pred_check_branch
      %1572 = sbr.rel (0) target = $region29
    $region28: #{tpu_custom_call.1} parent=1 // pred_region
      %1574 = dma.done [#allocation3], 32
    $region29: #{tpu_custom_call.1} parent=1 // pred_fallthru
      _
    %1575 = vsyncpa [#allocation3], 1

</llo_original>
